<compile_context>
chip_gen: v5e
topology: v5e:2x2
jax: 0.10.0
libtpu: 0.0.40
codegen_flags: <defaults>
</compile_context>

<pallas_src>
import jax
import jax.numpy as jnp
from jax.experimental import pallas as pl
from jax.experimental.pallas import tpu as pltpu


H1_LOGICAL, H2_LOGICAL = 400, 300      # PyTorch module hidden sizes
H1_PAD, H2_PAD = 512, 384              # lane-dense (128-multiple) padded sizes

_MAX_FUSED_ROWS = 512                  # batches up to this run as one grid cell
_TARGET_TILE_ROWS = 512                # target tile for the tiled (large-B) path


def _round_up(n, m):
    return (n + m - 1) // m * m


# ----------------------------------------------------------------------------
# Kernel bodies
# ----------------------------------------------------------------------------

def _mlp_head(xu, w1, b1, w2, b2, w3_row, b3):
    """One Q head: Linear -> ReLU -> Linear -> ReLU -> Linear.

    Matmuls accumulate in f32 on the MXU; bias/ReLU stay f32 on the VPU.
    The final layer is an NT dot_general (contract both operands' dim 1) so it
    emits a lane-dense (1, tb) row directly -- no narrow column output.
    """
    wdt = w1.dtype
    h1 = jnp.dot(xu, w1, preferred_element_type=jnp.float32)
    h1 = jnp.maximum(h1 + b1.astype(jnp.float32), 0.0)
    h2 = jnp.dot(h1.astype(wdt), w2, preferred_element_type=jnp.float32)
    h2 = jnp.maximum(h2 + b2.astype(jnp.float32), 0.0)
    # (1, H2) x (tb, H2) contracting dim 1 on both -> (1, tb)   (q.k^T pattern)
    q = jax.lax.dot_general(
        w3_row, h2.astype(wdt),
        dimension_numbers=(((1,), (1,)), ((), ())),
        preferred_element_type=jnp.float32)
    return q + b3.astype(jnp.float32)


def _critic_kernel_fused(xu_ref, w1_ref, b1_ref, w2_ref, b2_ref, w3_ref,
                         b3_ref, out_ref):
    """Single grid cell: all heads computed in one step (small/medium batch)."""
    xu = xu_ref[...].astype(w1_ref.dtype)
    for h in range(w1_ref.shape[0]):          # static unroll over 1 or 2 heads
        q = _mlp_head(xu, w1_ref[h], b1_ref[h], w2_ref[h], b2_ref[h],
                      w3_ref[h], b3_ref[h])
        out_ref[h] = q.astype(out_ref.dtype)  # (1, tb) lane-dense row


def _critic_kernel_tiled(xu_ref, w1_ref, b1_ref, w2_ref, b2_ref, w3_ref,
                         b3_ref, out_ref):
    """(head, batch-tile) grid cell: weights resident across the batch axis."""
    b = pl.program_id(1)
    xu = xu_ref[...].astype(w1_ref.dtype)
    q = _mlp_head(xu, w1_ref[0], b1_ref[0], w2_ref[0], b2_ref[0],
                  w3_ref[0], b3_ref[0])
    # Output block (1, nb, tb) is VMEM-resident across the batch axis
    # (index_map constant in b); write this tile's lane-dense row.
    out_ref[0, pl.ds(b, 1), :] = q.astype(out_ref.dtype)


# ----------------------------------------------------------------------------
# pallas_call wrapper
# ----------------------------------------------------------------------------

def _tiled_dim_semantics(n_heads):
    """Head axis mapping.  Batch axis must be 'arbitrary' because the output
    slab is resident across it.  On v7x pin the 2-entry head axis to the two
    TensorCores so each core fetches exactly one head's weights."""
    kind = ""
    try:
        kind = jax.devices()[0].device_kind.lower()
    except Exception:
        pass
    core_parallel = getattr(pltpu, "CORE_PARALLEL", None)
    arbitrary = getattr(pltpu, "ARBITRARY", "arbitrary")
    if n_heads == 2 and core_parallel is not None and "v7" in kind:
        return (core_parallel, arbitrary)
    return ("parallel", "arbitrary")


def _run_heads(xu, w1, b1, w2, b2, w3, b3):
    """Run the stacked Q heads on the concatenated (B, S+A) input.

    Returns (n_heads, B) float32.
    """
    B, d_in = xu.shape
    n_heads, _, h1d = w1.shape
    h2d = w2.shape[2]

    if B <= _MAX_FUSED_ROWS:
        nb = 1
        tb = _round_up(max(B, 1), 8)
    else:
        nb = pl.cdiv(B, _TARGET_TILE_ROWS)
        tb = _round_up(pl.cdiv(B, nb), 8)      # near-equal tiles, minimal padding
    b_pad = nb * tb
    if b_pad != B:
        xu = jnp.pad(xu, ((0, b_pad - B), (0, 0)))

    flops = 2 * n_heads * b_pad * (d_in * h1d + h1d * h2d + h2d)
    bytes_accessed = (
        int(xu.size) * xu.dtype.itemsize
        + sum(int(a.size) * a.dtype.itemsize for a in (w1, b1, w2, b2, w3, b3))
        + n_heads * b_pad * 4)
    cost = pl.CostEstimate(flops=flops, transcendentals=0,
                           bytes_accessed=bytes_accessed)

    if nb == 1:
        # Whole batch fits one tile: both heads in a single grid cell -> one
        # prologue/epilogue and one weight fetch total (latency-critical path).
        zero2 = lambda i: (0, 0)
        zero3 = lambda i: (0, 0, 0)
        out = pl.pallas_call(
            _critic_kernel_fused,
            out_shape=jax.ShapeDtypeStruct((n_heads, 1, tb), jnp.float32),
            grid_spec=pltpu.PrefetchScalarGridSpec(
                num_scalar_prefetch=0,
                grid=(1,),
                in_specs=[
                    pl.BlockSpec((tb, d_in), zero2),            # xu
                    pl.BlockSpec((n_heads, d_in, h1d), zero3),  # W1
                    pl.BlockSpec((n_heads, 1, h1d), zero3),     # b1
                    pl.BlockSpec((n_heads, h1d, h2d), zero3),   # W2
                    pl.BlockSpec((n_heads, 1, h2d), zero3),     # b2
                    pl.BlockSpec((n_heads, 1, h2d), zero3),     # W3 (row form)
                    pl.BlockSpec((n_heads, 1, 1), zero3),       # b3
                ],
                out_specs=pl.BlockSpec((n_heads, 1, tb), zero3),
            ),
            compiler_params=pltpu.CompilerParams(
                dimension_semantics=("arbitrary",)),
            cost_estimate=cost,
        )(xu, w1, b1, w2, b2, w3, b3)
    else:
        batch_map = lambda h, b: (b, 0)
        head_map = lambda h, b: (h, 0, 0)
        out = pl.pallas_call(
            _critic_kernel_tiled,
            out_shape=jax.ShapeDtypeStruct((n_heads, nb, tb), jnp.float32),
            grid_spec=pltpu.PrefetchScalarGridSpec(
                num_scalar_prefetch=0,
                grid=(n_heads, nb),   # heads outer -> weights DMA'd once/head
                in_specs=[
                    pl.BlockSpec((tb, d_in), batch_map),        # xu tile
                    pl.BlockSpec((1, d_in, h1d), head_map),     # W1
                    pl.BlockSpec((1, 1, h1d), head_map),        # b1
                    pl.BlockSpec((1, h1d, h2d), head_map),      # W2
                    pl.BlockSpec((1, 1, h2d), head_map),        # b2
                    pl.BlockSpec((1, 1, h2d), head_map),        # W3 (row form)
                    pl.BlockSpec((1, 1, 1), head_map),          # b3
                ],
                # Per-head output slab resident across the batch axis.
                out_specs=pl.BlockSpec((1, nb, tb), head_map),
            ),
            compiler_params=pltpu.CompilerParams(
                dimension_semantics=_tiled_dim_semantics(n_heads)),
            cost_estimate=cost,
        )(xu, w1, b1, w2, b2, w3, b3)

    return out.reshape(n_heads, b_pad)[:, :B]


# ----------------------------------------------------------------------------
# Parameter init / packing (mirrors the PyTorch module)
# ----------------------------------------------------------------------------

def init_critic_params(key, state_dim, action_dim):
    """Logical (unpadded) params mirroring nn.Linear default init
    (uniform +/- 1/sqrt(fan_in)); W stored as (in_features, out_features)."""
    dims = [
        (state_dim + action_dim, H1_LOGICAL),  # l1
        (H1_LOGICAL, H2_LOGICAL),              # l2
        (H2_LOGICAL, 1),                       # l3
        (state_dim + action_dim, H1_LOGICAL),  # l4
        (H1_LOGICAL, H2_LOGICAL),              # l5
        (H2_LOGICAL, 1),                       # l6
    ]
    params = []
    for fan_in, fan_out in dims:
        key, kw, kb = jax.random.split(key, 3)
        bound = 1.0 / (fan_in ** 0.5)
        w = jax.random.uniform(kw, (fan_in, fan_out), jnp.float32, -bound, bound)
        b = jax.random.uniform(kb, (1, fan_out), jnp.float32, -bound, bound)
        params.append((w, b))
    return params


def pack_critic_params(params, weight_dtype=jnp.bfloat16):
    """Pack params for the kernel: stack both heads on a leading axis, zero-pad
    hidden dims to 512/384 (exact), store the final layer as a (1, H2_PAD) ROW
    so the kernel emits a lane-dense output, and store weights in bf16 by
    default (biases stay f32; all bias/ReLU/accumulation math is f32)."""

    def pack_head(w1, b1, w2, b2, w3, b3):
        d_in = w1.shape[0]
        w1p = jnp.zeros((d_in, H1_PAD), jnp.float32).at[:, :H1_LOGICAL].set(w1)
        b1p = jnp.zeros((1, H1_PAD), jnp.float32).at[:, :H1_LOGICAL].set(b1)
        w2p = jnp.zeros((H1_PAD, H2_PAD), jnp.float32).at[
            :H1_LOGICAL, :H2_LOGICAL].set(w2)
        b2p = jnp.zeros((1, H2_PAD), jnp.float32).at[:, :H2_LOGICAL].set(b2)
        w3p = jnp.zeros((1, H2_PAD), jnp.float32).at[:, :H2_LOGICAL].set(w3.T)
        return (w1p, b1p, w2p, b2p, w3p, b3)

    heads = [pack_head(*params[0], *params[1], *params[2]),
             pack_head(*params[3], *params[4], *params[5])]
    names = ("w1", "b1", "w2", "b2", "w3", "b3")
    packed = {}
    for i, name in enumerate(names):
        arr = jnp.stack([heads[0][i], heads[1][i]], axis=0)
        if name.startswith("w"):
            arr = arr.astype(weight_dtype)
        packed[name] = arr
    return packed


def critic_forward(packed, x, u):
    """Equivalent of Critic.forward: returns (q1, q2), each of shape (B, 1)."""
    xu = jnp.concatenate([x, u], axis=1)
    q = _run_heads(xu, packed["w1"], packed["b1"], packed["w2"],
                   packed["b2"], packed["w3"], packed["b3"])
    return q[0][:, None], q[1][:, None]


def critic_q1(packed, x, u):
    """Equivalent of Critic.Q1 (head 0 only)."""
    xu = jnp.concatenate([x, u], axis=1)
    head0 = {k: v[0:1] for k, v in packed.items()}
    q = _run_heads(xu, head0["w1"], head0["b1"], head0["w2"],
                   head0["b2"], head0["w3"], head0["b3"])
    return q[0][:, None]


def _reference_forward(params, x, u):
    xu = jnp.concatenate([x, u], axis=1)

    def head(p):
        (w1, b1), (w2, b2), (w3, b3) = p
        h = jnp.maximum(xu @ w1 + b1, 0.0)
        h = jnp.maximum(h @ w2 + b2, 0.0)
        return h @ w3 + b3

    return head(params[:3]), head(params[3:])


if __name__ == "__main__":
    state_dim, action_dim = 16, 4
    key = jax.random.PRNGKey(0)
    kp, kx, ku, kxm, kum, kxl, kul = jax.random.split(key, 7)

    params = init_critic_params(kp, state_dim, action_dim)
    packed_f32 = pack_critic_params(params, weight_dtype=jnp.float32)
    packed_bf16 = pack_critic_params(params)   # bf16 weights (default)

    # --- small batch (B=2), f32 weights: single fused grid cell, exact path ---
    B = 2
    x = jax.random.normal(kx, (B, state_dim), jnp.float32)
    u = jax.random.normal(ku, (B, action_dim), jnp.float32)
    q1, q2 = critic_forward(packed_f32, x, u)
    q1 = jax.block_until_ready(q1)
    q2 = jax.block_until_ready(q2)
    q1_only = jax.block_until_ready(critic_q1(packed_f32, x, u))
    r1, r2 = _reference_forward(params, x, u)
    assert q1.shape == (B, 1) and q2.shape == (B, 1)
    assert jnp.allclose(q1, r1, atol=1e-4, rtol=1e-4)
    assert jnp.allclose(q2, r2, atol=1e-4, rtol=1e-4)
    assert jnp.allclose(q1_only, r1, atol=1e-4, rtol=1e-4)

    # --- medium batch (B=300): still a single fused cell (tb=304) ---
    Bm = 300
    xm = jax.random.normal(kxm, (Bm, state_dim), jnp.float32)
    um = jax.random.normal(kum, (Bm, action_dim), jnp.float32)
    m1, m2 = critic_forward(packed_f32, xm, um)
    m1 = jax.block_until_ready(m1)
    m2 = jax.block_until_ready(m2)
    mr1, mr2 = _reference_forward(params, xm, um)
    assert m1.shape == (Bm, 1) and m2.shape == (Bm, 1)
    assert jnp.allclose(m1, mr1, atol=1e-4, rtol=1e-4)
    assert jnp.allclose(m2, mr2, atol=1e-4, rtol=1e-4)

    # --- large batch (B=600): tiled path, grid=(2 heads, 2 batch tiles) ---
    Bl = 600
    xl = jax.random.normal(kxl, (Bl, state_dim), jnp.float32)
    ul = jax.random.normal(kul, (Bl, action_dim), jnp.float32)
    l1, l2 = critic_forward(packed_f32, xl, ul)
    l1 = jax.block_until_ready(l1)
    l2 = jax.block_until_ready(l2)
    lr1, lr2 = _reference_forward(params, xl, ul)
    assert l1.shape == (Bl, 1) and l2.shape == (Bl, 1)
    assert jnp.allclose(l1, lr1, atol=1e-4, rtol=1e-4)
    assert jnp.allclose(l2, lr2, atol=1e-4, rtol=1e-4)

    # --- bf16-weight default packing: loose tolerance vs f32 reference ---
    # (inputs are also cast to bf16 for the matmuls; accumulation stays f32)
    s1, s2 = critic_forward(packed_bf16, x, u)
    s1 = jax.block_until_ready(s1)
    s2 = jax.block_until_ready(s2)
    assert jnp.allclose(s1, r1, atol=5e-2, rtol=5e-2)
    assert jnp.allclose(s2, r2, atol=5e-2, rtol=5e-2)

    b1_, b2_ = critic_forward(packed_bf16, xl, ul)
    b1_ = jax.block_until_ready(b1_)
    b2_ = jax.block_until_ready(b2_)
    assert jnp.allclose(b1_, lr1, atol=5e-2, rtol=5e-2)
    assert jnp.allclose(b2_, lr2, atol=5e-2, rtol=5e-2)

    print("KERNEL_OK")
</pallas_src>

<mosaic_0001>
module attributes {stable_mosaic.version = 11 : i64} {
  func.func @_critic_kernel_fused(%arg0: i32, %arg1: memref<8x20xf32, #tpu.memory_space<vmem>>, %arg2: memref<2x20x512xf32, #tpu.memory_space<vmem>>, %arg3: memref<2x1x512xf32, #tpu.memory_space<vmem>>, %arg4: memref<2x512x384xf32, #tpu.memory_space<vmem>>, %arg5: memref<2x1x384xf32, #tpu.memory_space<vmem>>, %arg6: memref<2x1x384xf32, #tpu.memory_space<vmem>>, %arg7: memref<2x1x1xf32, #tpu.memory_space<vmem>>, %arg8: memref<2x1x8xf32, #tpu.memory_space<vmem>>) attributes {dimension_semantics = [#tpu.dimension_semantics<arbitrary>], iteration_bounds = array<i64: 1>, scalar_prefetch = 0 : i64, scratch_operands = 0 : i64, tpu.core_type = #tpu.core_type<tc>, window_params = [{pipeline_mode = #tpu.pipeline_mode<synchronous>, transform_indices = @transform_0, window_bounds = array<i64: 8, 20>}, {pipeline_mode = #tpu.pipeline_mode<synchronous>, transform_indices = @transform_1, window_bounds = array<i64: 2, 20, 512>}, {pipeline_mode = #tpu.pipeline_mode<synchronous>, transform_indices = @transform_2, window_bounds = array<i64: 2, 1, 512>}, {pipeline_mode = #tpu.pipeline_mode<synchronous>, transform_indices = @transform_3, window_bounds = array<i64: 2, 512, 384>}, {pipeline_mode = #tpu.pipeline_mode<synchronous>, transform_indices = @transform_4, window_bounds = array<i64: 2, 1, 384>}, {pipeline_mode = #tpu.pipeline_mode<synchronous>, transform_indices = @transform_5, window_bounds = array<i64: 2, 1, 384>}, {pipeline_mode = #tpu.pipeline_mode<synchronous>, transform_indices = @transform_6, window_bounds = array<i64: 2, 1, 1>}, {pipeline_mode = #tpu.pipeline_mode<synchronous>, transform_indices = @transform_7, window_bounds = array<i64: 2, 1, 8>}]} {
    %c0 = arith.constant 0 : index
    %c0_0 = arith.constant 0 : index
    %0 = vector.load %arg1[%c0, %c0_0] : memref<8x20xf32, #tpu.memory_space<vmem>>, vector<8x20xf32>
    %c0_1 = arith.constant 0 : index
    %c0_2 = arith.constant 0 : index
    %c0_3 = arith.constant 0 : index
    %1 = vector.load %arg2[%c0_1, %c0_2, %c0_3] : memref<2x20x512xf32, #tpu.memory_space<vmem>>, vector<1x20x512xf32>
    %2 = vector.shape_cast %1 : vector<1x20x512xf32> to vector<20x512xf32>
    %c0_4 = arith.constant 0 : index
    %c0_5 = arith.constant 0 : index
    %c0_6 = arith.constant 0 : index
    %3 = vector.load %arg3[%c0_4, %c0_5, %c0_6] : memref<2x1x512xf32, #tpu.memory_space<vmem>>, vector<1x1x512xf32>
    %4 = vector.shape_cast %3 : vector<1x1x512xf32> to vector<1x512xf32>
    %c0_7 = arith.constant 0 : index
    %c0_8 = arith.constant 0 : index
    %c0_9 = arith.constant 0 : index
    %5 = vector.load %arg4[%c0_7, %c0_8, %c0_9] : memref<2x512x384xf32, #tpu.memory_space<vmem>>, vector<1x512x384xf32>
    %6 = vector.shape_cast %5 : vector<1x512x384xf32> to vector<512x384xf32>
    %c0_10 = arith.constant 0 : index
    %c0_11 = arith.constant 0 : index
    %c0_12 = arith.constant 0 : index
    %7 = vector.load %arg5[%c0_10, %c0_11, %c0_12] : memref<2x1x384xf32, #tpu.memory_space<vmem>>, vector<1x1x384xf32>
    %8 = vector.shape_cast %7 : vector<1x1x384xf32> to vector<1x384xf32>
    %c0_13 = arith.constant 0 : index
    %c0_14 = arith.constant 0 : index
    %c0_15 = arith.constant 0 : index
    %9 = vector.load %arg6[%c0_13, %c0_14, %c0_15] : memref<2x1x384xf32, #tpu.memory_space<vmem>>, vector<1x1x384xf32>
    %10 = vector.shape_cast %9 : vector<1x1x384xf32> to vector<1x384xf32>
    %c0_16 = arith.constant 0 : index
    %c0_17 = arith.constant 0 : index
    %c0_18 = arith.constant 0 : index
    %11 = vector.load %arg7[%c0_16, %c0_17, %c0_18] : memref<2x1x1xf32, #tpu.memory_space<vmem>>, vector<1x1x1xf32>
    %12 = vector.shape_cast %11 : vector<1x1x1xf32> to vector<1x1xf32>
    %cst = arith.constant dense<0.000000e+00> : vector<8x512xf32>
    %13 = tpu.matmul %0, %2, %cst {dimension_numbers = #tpu.dot_dimension_numbers<[1], [0], [0], [1], [0, 0, 1, 1], [], []>} : vector<8x20xf32>, vector<20x512xf32>, vector<8x512xf32> -> vector<8x512xf32>
    %14 = vector.broadcast %4 : vector<1x512xf32> to vector<8x512xf32>
    %15 = arith.addf %13, %14 : vector<8x512xf32>
    %cst_19 = arith.constant 0.000000e+00 : f32
    %16 = vector.broadcast %cst_19 : f32 to vector<8x512xf32>
    %17 = arith.maximumf %15, %16 : vector<8x512xf32>
    %cst_20 = arith.constant dense<0.000000e+00> : vector<8x384xf32>
    %18 = tpu.matmul %17, %6, %cst_20 {dimension_numbers = #tpu.dot_dimension_numbers<[1], [0], [0], [1], [0, 0, 1, 1], [], []>} : vector<8x512xf32>, vector<512x384xf32>, vector<8x384xf32> -> vector<8x384xf32>
    %19 = vector.broadcast %8 : vector<1x384xf32> to vector<8x384xf32>
    %20 = arith.addf %18, %19 : vector<8x384xf32>
    %cst_21 = arith.constant 0.000000e+00 : f32
    %21 = vector.broadcast %cst_21 : f32 to vector<8x384xf32>
    %22 = arith.maximumf %20, %21 : vector<8x384xf32>
    %cst_22 = arith.constant dense<0.000000e+00> : vector<1x8xf32>
    %23 = tpu.matmul %10, %22, %cst_22 {dimension_numbers = #tpu.dot_dimension_numbers<[1], [1], [0], [0], [0, 0, 1, 0], [], []>} : vector<1x384xf32>, vector<8x384xf32>, vector<1x8xf32> -> vector<1x8xf32>
    %24 = vector.broadcast %12 : vector<1x1xf32> to vector<1x8xf32>
    %25 = arith.addf %23, %24 : vector<1x8xf32>
    %c0_23 = arith.constant 0 : index
    %c0_24 = arith.constant 0 : index
    %c0_25 = arith.constant 0 : index
    %26 = vector.load %arg8[%c0_23, %c0_24, %c0_25] : memref<2x1x8xf32, #tpu.memory_space<vmem>>, vector<1x1x8xf32>
    %27 = vector.shape_cast %26 : vector<1x1x8xf32> to vector<1x8xf32>
    %28 = vector.shape_cast %25 : vector<1x8xf32> to vector<1x1x8xf32>
    tpu.vector_store %arg8[%c0_23, %c0_24, %c0_25], %28 {strides = array<i32>} : memref<2x1x8xf32, #tpu.memory_space<vmem>>, vector<1x1x8xf32>,
    %c1 = arith.constant 1 : index
    %c0_26 = arith.constant 0 : index
    %c0_27 = arith.constant 0 : index
    %29 = vector.load %arg2[%c1, %c0_26, %c0_27] : memref<2x20x512xf32, #tpu.memory_space<vmem>>, vector<1x20x512xf32>
    %30 = vector.shape_cast %29 : vector<1x20x512xf32> to vector<20x512xf32>
    %c1_28 = arith.constant 1 : index
    %c0_29 = arith.constant 0 : index
    %c0_30 = arith.constant 0 : index
    %31 = vector.load %arg3[%c1_28, %c0_29, %c0_30] : memref<2x1x512xf32, #tpu.memory_space<vmem>>, vector<1x1x512xf32>
    %32 = vector.shape_cast %31 : vector<1x1x512xf32> to vector<1x512xf32>
    %c1_31 = arith.constant 1 : index
    %c0_32 = arith.constant 0 : index
    %c0_33 = arith.constant 0 : index
    %33 = vector.load %arg4[%c1_31, %c0_32, %c0_33] : memref<2x512x384xf32, #tpu.memory_space<vmem>>, vector<1x512x384xf32>
    %34 = vector.shape_cast %33 : vector<1x512x384xf32> to vector<512x384xf32>
    %c1_34 = arith.constant 1 : index
    %c0_35 = arith.constant 0 : index
    %c0_36 = arith.constant 0 : index
    %35 = vector.load %arg5[%c1_34, %c0_35, %c0_36] : memref<2x1x384xf32, #tpu.memory_space<vmem>>, vector<1x1x384xf32>
    %36 = vector.shape_cast %35 : vector<1x1x384xf32> to vector<1x384xf32>
    %c1_37 = arith.constant 1 : index
    %c0_38 = arith.constant 0 : index
    %c0_39 = arith.constant 0 : index
    %37 = vector.load %arg6[%c1_37, %c0_38, %c0_39] : memref<2x1x384xf32, #tpu.memory_space<vmem>>, vector<1x1x384xf32>
    %38 = vector.shape_cast %37 : vector<1x1x384xf32> to vector<1x384xf32>
    %c1_40 = arith.constant 1 : index
    %c0_41 = arith.constant 0 : index
    %c0_42 = arith.constant 0 : index
    %39 = vector.load %arg7[%c1_40, %c0_41, %c0_42] : memref<2x1x1xf32, #tpu.memory_space<vmem>>, vector<1x1x1xf32>
    %40 = vector.shape_cast %39 : vector<1x1x1xf32> to vector<1x1xf32>
    %cst_43 = arith.constant dense<0.000000e+00> : vector<8x512xf32>
    %41 = tpu.matmul %0, %30, %cst_43 {dimension_numbers = #tpu.dot_dimension_numbers<[1], [0], [0], [1], [0, 0, 1, 1], [], []>} : vector<8x20xf32>, vector<20x512xf32>, vector<8x512xf32> -> vector<8x512xf32>
    %42 = vector.broadcast %32 : vector<1x512xf32> to vector<8x512xf32>
    %43 = arith.addf %41, %42 : vector<8x512xf32>
    %cst_44 = arith.constant 0.000000e+00 : f32
    %44 = vector.broadcast %cst_44 : f32 to vector<8x512xf32>
    %45 = arith.maximumf %43, %44 : vector<8x512xf32>
    %cst_45 = arith.constant dense<0.000000e+00> : vector<8x384xf32>
    %46 = tpu.matmul %45, %34, %cst_45 {dimension_numbers = #tpu.dot_dimension_numbers<[1], [0], [0], [1], [0, 0, 1, 1], [], []>} : vector<8x512xf32>, vector<512x384xf32>, vector<8x384xf32> -> vector<8x384xf32>
    %47 = vector.broadcast %36 : vector<1x384xf32> to vector<8x384xf32>
    %48 = arith.addf %46, %47 : vector<8x384xf32>
    %cst_46 = arith.constant 0.000000e+00 : f32
    %49 = vector.broadcast %cst_46 : f32 to vector<8x384xf32>
    %50 = arith.maximumf %48, %49 : vector<8x384xf32>
    %cst_47 = arith.constant dense<0.000000e+00> : vector<1x8xf32>
    %51 = tpu.matmul %38, %50, %cst_47 {dimension_numbers = #tpu.dot_dimension_numbers<[1], [1], [0], [0], [0, 0, 1, 0], [], []>} : vector<1x384xf32>, vector<8x384xf32>, vector<1x8xf32> -> vector<1x8xf32>
    %52 = vector.broadcast %40 : vector<1x1xf32> to vector<1x8xf32>
    %53 = arith.addf %51, %52 : vector<1x8xf32>
    %c1_48 = arith.constant 1 : index
    %c0_49 = arith.constant 0 : index
    %c0_50 = arith.constant 0 : index
    %54 = vector.load %arg8[%c1_48, %c0_49, %c0_50] : memref<2x1x8xf32, #tpu.memory_space<vmem>>, vector<1x1x8xf32>
    %55 = vector.shape_cast %54 : vector<1x1x8xf32> to vector<1x8xf32>
    %56 = vector.shape_cast %53 : vector<1x8xf32> to vector<1x1x8xf32>
    tpu.vector_store %arg8[%c1_48, %c0_49, %c0_50], %56 {strides = array<i32>} : memref<2x1x8xf32, #tpu.memory_space<vmem>>, vector<1x1x8xf32>,
    return
  }
  func.func @transform_0(%arg0: i32) -> (i32, i32) {
    %c0_i32 = arith.constant 0 : i32
    %c0_i32_0 = arith.constant 0 : i32
    %c0_i32_1 = arith.constant 0 : i32
    return %c0_i32, %c0_i32_0 : i32, i32
  }
  func.func @transform_1(%arg0: i32) -> (i32, i32, i32) {
    %c0_i32 = arith.constant 0 : i32
    %c0_i32_0 = arith.constant 0 : i32
    %c0_i32_1 = arith.constant 0 : i32
    %c0_i32_2 = arith.constant 0 : i32
    return %c0_i32, %c0_i32_0, %c0_i32_1 : i32, i32, i32
  }
  func.func @transform_2(%arg0: i32) -> (i32, i32, i32) {
    %c0_i32 = arith.constant 0 : i32
    %c0_i32_0 = arith.constant 0 : i32
    %c0_i32_1 = arith.constant 0 : i32
    %c0_i32_2 = arith.constant 0 : i32
    return %c0_i32, %c0_i32_0, %c0_i32_1 : i32, i32, i32
  }
  func.func @transform_3(%arg0: i32) -> (i32, i32, i32) {
    %c0_i32 = arith.constant 0 : i32
    %c0_i32_0 = arith.constant 0 : i32
    %c0_i32_1 = arith.constant 0 : i32
    %c0_i32_2 = arith.constant 0 : i32
    return %c0_i32, %c0_i32_0, %c0_i32_1 : i32, i32, i32
  }
  func.func @transform_4(%arg0: i32) -> (i32, i32, i32) {
    %c0_i32 = arith.constant 0 : i32
    %c0_i32_0 = arith.constant 0 : i32
    %c0_i32_1 = arith.constant 0 : i32
    %c0_i32_2 = arith.constant 0 : i32
    return %c0_i32, %c0_i32_0, %c0_i32_1 : i32, i32, i32
  }
  func.func @transform_5(%arg0: i32) -> (i32, i32, i32) {
    %c0_i32 = arith.constant 0 : i32
    %c0_i32_0 = arith.constant 0 : i32
    %c0_i32_1 = arith.constant 0 : i32
    %c0_i32_2 = arith.constant 0 : i32
    return %c0_i32, %c0_i32_0, %c0_i32_1 : i32, i32, i32
  }
  func.func @transform_6(%arg0: i32) -> (i32, i32, i32) {
    %c0_i32 = arith.constant 0 : i32
    %c0_i32_0 = arith.constant 0 : i32
    %c0_i32_1 = arith.constant 0 : i32
    %c0_i32_2 = arith.constant 0 : i32
    return %c0_i32, %c0_i32_0, %c0_i32_1 : i32, i32, i32
  }
  func.func @transform_7(%arg0: i32) -> (i32, i32, i32) {
    %c0_i32 = arith.constant 0 : i32
    %c0_i32_0 = arith.constant 0 : i32
    %c0_i32_1 = arith.constant 0 : i32
    %c0_i32_2 = arith.constant 0 : i32
    return %c0_i32, %c0_i32_0, %c0_i32_1 : i32, i32, i32
  }
}

</mosaic_0001>

<llo_original>
// kernel: tpu_custom_call.1
$region0: #{tpu_custom_call.1}
  #allocation0 [shape = 'u32[]', space=smem, size = 0x4, offset = 0x4, fixed_abs, tag = 'smem constant byte address 0x4 - core index']
  #allocation1 [shape = 'u32[72,128]{1,0:T(1,128)}', space=vmem, size = 0x9000, scoped, tag = 'internal scratch']
  %s0 = inlined_call_operand.hbm [shape: f32[8,20], index: 0, kind: input, shape index: {}]
  %s1 = inlined_call_operand.vmem [shape: f32[2,20,512], index: 1, kind: input, shape index: {}]
  %s2 = inlined_call_operand.hbm [shape: f32[2,1,512], index: 2, kind: input, shape index: {}]
  %s3 = inlined_call_operand.hbm [shape: f32[2,512,384], index: 3, kind: input, shape index: {}]
  %s4 = inlined_call_operand.hbm [shape: f32[2,1,384], index: 4, kind: input, shape index: {}]
  %s5 = inlined_call_operand.hbm [shape: f32[2,1,384], index: 5, kind: input, shape index: {}]
  %s6 = inlined_call_operand.vmem [shape: f32[2,1,1], index: 6, kind: input, shape index: {}]
  %s7 = inlined_call_operand.hbm [shape: f32[2,1,8], index: 7, kind: output, shape index: {}]
  %s8 = sld [smem:[#allocation0]]
  $region58: #{tpu_custom_call.1} parent=0
    _
  %s10 = ssub.s32 1, %s8
  %s11 = scalar_select 0, %s10, %s8
  $region1: #{tpu_custom_call.1} parent=0
    #allocation2 [shape = 'u8[4096]{0}', space=vmem, size = 0x1000, scoped, tag = 'input window, operand 0, single buffered']
    #allocation3 [shape = 's32[1]{0}', space=sflag, size = 0x4, scoped, tag = 'scoped memory for tpu_custom_call.1']
    #allocation4 [shape = 's32[1]{0}', space=sflag, size = 0x4, scoped, tag = 'scoped memory for tpu_custom_call.1']
    #allocation5 [shape = 'u8[4096]{0}', space=vmem, size = 0x1000, scoped, tag = 'input window, operand 2, single buffered']
    #allocation6 [shape = 's32[1]{0}', space=sflag, size = 0x4, scoped, tag = 'scoped memory for tpu_custom_call.1']
    #allocation7 [shape = 'u8[1572864]{0}', space=vmem, size = 0x180000, scoped, tag = 'input window, operand 3, single buffered']
    #allocation8 [shape = 'u8[3072]{0}', space=vmem, size = 0xc00, scoped, tag = 'input window, operand 4, single buffered']
    #allocation9 [shape = 's32[1]{0}', space=sflag, size = 0x4, scoped, tag = 'scoped memory for tpu_custom_call.1']
    #allocation10 [shape = 'u8[3072]{0}', space=vmem, size = 0xc00, scoped, tag = 'input window, operand 5, single buffered']
    #allocation11 [shape = 'u8[1024]{0}', space=vmem, size = 0x400, scoped, tag = 'output window, operand 0, single buffered']
    %12 = vsyncpa [#allocation3], 0
    %13 = vsyncpa [#allocation6], 0
    %14 = vsyncpa [#allocation9], 0
    %15 = vsyncpa [#allocation4], 0
    // Predicated region
    $region2: #{tpu_custom_call.1} parent=1 // pred_check
      _
    $region3: #{tpu_custom_call.1} parent=1 // pred_check_branch
      %17 = sbr.rel (0) target = $region5
    $region4: #{tpu_custom_call.1} parent=1 // pred_region
      %19 = vsyncadd [#allocation3], 0
      %s21 = sshll.u32 %s0, 4
      %s22 = int_to_ptr.hbm [resolvable:$true] %s21
      %s23 = sshll.u32 [#allocation2], 4
      %s24 = int_to_ptr.vmem [resolvable:$true] %s23
      %26 = dma.hbm_to_vmem [thread:$0]  %s22, 128, %s24, [#allocation3]
    $region5: #{tpu_custom_call.1} parent=1 // pred_fallthru
      _
    // Predicated region
    $region6: #{tpu_custom_call.1} parent=1 // pred_check
      _
    $region7: #{tpu_custom_call.1} parent=1 // pred_check_branch
      %28 = sbr.rel (0) target = $region9
    $region8: #{tpu_custom_call.1} parent=1 // pred_region
      _
    $region9: #{tpu_custom_call.1} parent=1 // pred_fallthru
      _
    // Predicated region
    $region10: #{tpu_custom_call.1} parent=1 // pred_check
      _
    $region11: #{tpu_custom_call.1} parent=1 // pred_check_branch
      %30 = sbr.rel (0) target = $region13
    $region12: #{tpu_custom_call.1} parent=1 // pred_region
      %32 = vsyncadd [#allocation6], 0
      %s33 = sshll.u32 %s2, 4
      %s34 = int_to_ptr.hbm [resolvable:$true] %s33
      %s35 = sshll.u32 [#allocation5], 4
      %s36 = int_to_ptr.vmem [resolvable:$true] %s35
      %41 = dma.hbm_to_vmem [thread:$0]  %s34, 128, %s36, [#allocation6], 64, 64, 4
    $region13: #{tpu_custom_call.1} parent=1 // pred_fallthru
      _
    // Predicated region
    $region14: #{tpu_custom_call.1} parent=1 // pred_check
      _
    $region15: #{tpu_custom_call.1} parent=1 // pred_check_branch
      %43 = sbr.rel (0) target = $region17
    $region16: #{tpu_custom_call.1} parent=1 // pred_region
      %45 = vsyncadd [#allocation6], 0
      %s46 = sshll.u32 %s3, 4
      %s47 = int_to_ptr.hbm [resolvable:$true] %s46
      %s48 = sshll.u32 [#allocation7], 4
      %s49 = int_to_ptr.vmem [resolvable:$true] %s48
      %54 = dma.hbm_to_vmem [thread:$0]  %s47, 49152, %s49, [#allocation6], 384, 384, 24
    $region17: #{tpu_custom_call.1} parent=1 // pred_fallthru
      _
    // Predicated region
    $region18: #{tpu_custom_call.1} parent=1 // pred_check
      _
    $region19: #{tpu_custom_call.1} parent=1 // pred_check_branch
      %56 = sbr.rel (0) target = $region21
    $region20: #{tpu_custom_call.1} parent=1 // pred_region
      %58 = vsyncadd [#allocation9], 0
      %s59 = sshll.u32 %s4, 4
      %s60 = int_to_ptr.hbm [resolvable:$true] %s59
      %s61 = sshll.u32 [#allocation8], 4
      %s62 = int_to_ptr.vmem [resolvable:$true] %s61
      %67 = dma.hbm_to_vmem [thread:$0]  %s60, 96, %s62, [#allocation9], 48, 48, 3
    $region21: #{tpu_custom_call.1} parent=1 // pred_fallthru
      _
    // Predicated region
    $region22: #{tpu_custom_call.1} parent=1 // pred_check
      _
    $region23: #{tpu_custom_call.1} parent=1 // pred_check_branch
      %69 = sbr.rel (0) target = $region25
    $region24: #{tpu_custom_call.1} parent=1 // pred_region
      %71 = vsyncadd [#allocation9], 0
      %s72 = sshll.u32 %s5, 4
      %s73 = int_to_ptr.hbm [resolvable:$true] %s72
      %s74 = sshll.u32 [#allocation10], 4
      %s75 = int_to_ptr.vmem [resolvable:$true] %s74
      %80 = dma.hbm_to_vmem [thread:$0]  %s73, 96, %s75, [#allocation9], 48, 48, 3
    $region25: #{tpu_custom_call.1} parent=1 // pred_fallthru
      _
    // Predicated region
    $region26: #{tpu_custom_call.1} parent=1 // pred_check
      _
    $region27: #{tpu_custom_call.1} parent=1 // pred_check_branch
      %82 = sbr.rel (0) target = $region29
    $region28: #{tpu_custom_call.1} parent=1 // pred_region
      _
    $region29: #{tpu_custom_call.1} parent=1 // pred_fallthru
      _
    // Predicated region
    $region30: #{tpu_custom_call.1} parent=1 // pred_check
      _
    $region31: #{tpu_custom_call.1} parent=1 // pred_check_branch
      %84 = sbr.rel (0) target = $region33
    $region32: #{tpu_custom_call.1} parent=1 // pred_region
      %86 = dma.done [#allocation3], 128
    $region33: #{tpu_custom_call.1} parent=1 // pred_fallthru
      _
    // Predicated region
    $region34: #{tpu_custom_call.1} parent=1 // pred_check
      _
    $region35: #{tpu_custom_call.1} parent=1 // pred_check_branch
      %88 = sbr.rel (0) target = $region37
    $region36: #{tpu_custom_call.1} parent=1 // pred_region
      %90 = dma.done [#allocation6], 128
    $region37: #{tpu_custom_call.1} parent=1 // pred_fallthru
      _
    // Predicated region
    $region38: #{tpu_custom_call.1} parent=1 // pred_check
      _
    $region39: #{tpu_custom_call.1} parent=1 // pred_check_branch
      %92 = sbr.rel (0) target = $region41
    $region40: #{tpu_custom_call.1} parent=1 // pred_region
      %94 = dma.done [#allocation6], 49152
    $region41: #{tpu_custom_call.1} parent=1 // pred_fallthru
      _
    // Predicated region
    $region42: #{tpu_custom_call.1} parent=1 // pred_check
      _
    $region43: #{tpu_custom_call.1} parent=1 // pred_check_branch
      %96 = sbr.rel (0) target = $region45
    $region44: #{tpu_custom_call.1} parent=1 // pred_region
      %98 = dma.done [#allocation9], 96
    $region45: #{tpu_custom_call.1} parent=1 // pred_fallthru
      _
    // Predicated region
    $region46: #{tpu_custom_call.1} parent=1 // pred_check
      _
    $region47: #{tpu_custom_call.1} parent=1 // pred_check_branch
      %100 = sbr.rel (0) target = $region49
    $region48: #{tpu_custom_call.1} parent=1 // pred_region
      %102 = dma.done [#allocation9], 96
    $region49: #{tpu_custom_call.1} parent=1 // pred_fallthru
      _
    %v103 = vld [vmem:[#allocation2] sm:$0xff]
    %v104 = vld [vmem:[%s1] sm:$0xff]
    %v105 = vld [vmem:[%s1 + $0x8] sm:$0xff]
    %v106 = vld [vmem:[%s1 + $0x10] sm:$0xff]
    %v107 = vld [vmem:[%s1 + $0x18] sm:$0xff]
    %v108 = vld [vmem:[%s1 + $0x20] sm:$0xff]
    %v109 = vld [vmem:[%s1 + $0x28] sm:$0xff]
    %v110 = vld [vmem:[%s1 + $0x30] sm:$0xff]
    %v111 = vld [vmem:[%s1 + $0x38] sm:$0xff]
    %v112 = vld [vmem:[%s1 + $0x40] sm:$0xf]
    %v113 = vld [vmem:[%s1 + $0x48] sm:$0xf]
    %v114 = vld [vmem:[%s1 + $0x50] sm:$0xf]
    %v115 = vld [vmem:[%s1 + $0x58] sm:$0xf]
    %v116 = vld [vmem:[#allocation5] sm:$0xf]
    %v117 = vld [vmem:[#allocation7] sm:$0xff]
    %v118 = vld [vmem:[#allocation7 + $0x8] sm:$0xff]
    %v119 = vld [vmem:[#allocation7 + $0x10] sm:$0xff]
    %v120 = vld [vmem:[#allocation7 + $0x18] sm:$0xff]
    %v121 = vld [vmem:[#allocation7 + $0x20] sm:$0xff]
    %v122 = vld [vmem:[#allocation7 + $0x28] sm:$0xff]
    %v123 = vld [vmem:[#allocation7 + $0x30] sm:$0xff]
    %v124 = vld [vmem:[#allocation7 + $0x38] sm:$0xff]
    %v125 = vld [vmem:[#allocation7 + $0x40] sm:$0xff]
    %v126 = vld [vmem:[#allocation7 + $0x48] sm:$0xff]
    %v127 = vld [vmem:[#allocation7 + $0x50] sm:$0xff]
    %v128 = vld [vmem:[#allocation7 + $0x58] sm:$0xff]
    %v129 = vld [vmem:[#allocation7 + $0x60] sm:$0xff]
    %v130 = vld [vmem:[#allocation7 + $0x68] sm:$0xff]
    %v131 = vld [vmem:[#allocation7 + $0x70] sm:$0xff]
    %v132 = vld [vmem:[#allocation7 + $0x78] sm:$0xff]
    %v133 = vld [vmem:[#allocation7 + $0x80] sm:$0xff]
    %v134 = vld [vmem:[#allocation7 + $0x88] sm:$0xff]
    %v135 = vld [vmem:[#allocation7 + $0x90] sm:$0xff]
    %v136 = vld [vmem:[#allocation7 + $0x98] sm:$0xff]
    %v137 = vld [vmem:[#allocation7 + $0xa0] sm:$0xff]
    %v138 = vld [vmem:[#allocation7 + $0xa8] sm:$0xff]
    %v139 = vld [vmem:[#allocation7 + $0xb0] sm:$0xff]
    %v140 = vld [vmem:[#allocation7 + $0xb8] sm:$0xff]
    %v141 = vld [vmem:[#allocation7 + $0xc0] sm:$0xff]
    %v142 = vld [vmem:[#allocation7 + $0xc8] sm:$0xff]
    %v143 = vld [vmem:[#allocation7 + $0xd0] sm:$0xff]
    %v144 = vld [vmem:[#allocation7 + $0xd8] sm:$0xff]
    %v145 = vld [vmem:[#allocation7 + $0xe0] sm:$0xff]
    %v146 = vld [vmem:[#allocation7 + $0xe8] sm:$0xff]
    %v147 = vld [vmem:[#allocation7 + $0xf0] sm:$0xff]
    %v148 = vld [vmem:[#allocation7 + $0xf8] sm:$0xff]
    %v149 = vld [vmem:[#allocation7 + $0x100] sm:$0xff]
    %v150 = vld [vmem:[#allocation7 + $0x108] sm:$0xff]
    %v151 = vld [vmem:[#allocation7 + $0x110] sm:$0xff]
    %v152 = vld [vmem:[#allocation7 + $0x118] sm:$0xff]
    %v153 = vld [vmem:[#allocation7 + $0x120] sm:$0xff]
    %v154 = vld [vmem:[#allocation7 + $0x128] sm:$0xff]
    %v155 = vld [vmem:[#allocation7 + $0x130] sm:$0xff]
    %v156 = vld [vmem:[#allocation7 + $0x138] sm:$0xff]
    %v157 = vld [vmem:[#allocation7 + $0x140] sm:$0xff]
    %v158 = vld [vmem:[#allocation7 + $0x148] sm:$0xff]
    %v159 = vld [vmem:[#allocation7 + $0x150] sm:$0xff]
    %v160 = vld [vmem:[#allocation7 + $0x158] sm:$0xff]
    %v161 = vld [vmem:[#allocation7 + $0x160] sm:$0xff]
    %v162 = vld [vmem:[#allocation7 + $0x168] sm:$0xff]
    %v163 = vld [vmem:[#allocation7 + $0x170] sm:$0xff]
    %v164 = vld [vmem:[#allocation7 + $0x178] sm:$0xff]
    %v165 = vld [vmem:[#allocation7 + $0x180] sm:$0xff]
    %v166 = vld [vmem:[#allocation7 + $0x188] sm:$0xff]
    %v167 = vld [vmem:[#allocation7 + $0x190] sm:$0xff]
    %v168 = vld [vmem:[#allocation7 + $0x198] sm:$0xff]
    %v169 = vld [vmem:[#allocation7 + $0x1a0] sm:$0xff]
    %v170 = vld [vmem:[#allocation7 + $0x1a8] sm:$0xff]
    %v171 = vld [vmem:[#allocation7 + $0x1b0] sm:$0xff]
    %v172 = vld [vmem:[#allocation7 + $0x1b8] sm:$0xff]
    %v173 = vld [vmem:[#allocation7 + $0x1c0] sm:$0xff]
    %v174 = vld [vmem:[#allocation7 + $0x1c8] sm:$0xff]
    %v175 = vld [vmem:[#allocation7 + $0x1d0] sm:$0xff]
    %v176 = vld [vmem:[#allocation7 + $0x1d8] sm:$0xff]
    %v177 = vld [vmem:[#allocation7 + $0x1e0] sm:$0xff]
    %v178 = vld [vmem:[#allocation7 + $0x1e8] sm:$0xff]
    %v179 = vld [vmem:[#allocation7 + $0x1f0] sm:$0xff]
    %v180 = vld [vmem:[#allocation7 + $0x1f8] sm:$0xff]
    %v181 = vld [vmem:[#allocation7 + $0x200] sm:$0xff]
    %v182 = vld [vmem:[#allocation7 + $0x208] sm:$0xff]
    %v183 = vld [vmem:[#allocation7 + $0x210] sm:$0xff]
    %v184 = vld [vmem:[#allocation7 + $0x218] sm:$0xff]
    %v185 = vld [vmem:[#allocation7 + $0x220] sm:$0xff]
    %v186 = vld [vmem:[#allocation7 + $0x228] sm:$0xff]
    %v187 = vld [vmem:[#allocation7 + $0x230] sm:$0xff]
    %v188 = vld [vmem:[#allocation7 + $0x238] sm:$0xff]
    %v189 = vld [vmem:[#allocation7 + $0x240] sm:$0xff]
    %v190 = vld [vmem:[#allocation7 + $0x248] sm:$0xff]
    %v191 = vld [vmem:[#allocation7 + $0x250] sm:$0xff]
    %v192 = vld [vmem:[#allocation7 + $0x258] sm:$0xff]
    %v193 = vld [vmem:[#allocation7 + $0x260] sm:$0xff]
    %v194 = vld [vmem:[#allocation7 + $0x268] sm:$0xff]
    %v195 = vld [vmem:[#allocation7 + $0x270] sm:$0xff]
    %v196 = vld [vmem:[#allocation7 + $0x278] sm:$0xff]
    %v197 = vld [vmem:[#allocation7 + $0x280] sm:$0xff]
    %v198 = vld [vmem:[#allocation7 + $0x288] sm:$0xff]
    %v199 = vld [vmem:[#allocation7 + $0x290] sm:$0xff]
    %v200 = vld [vmem:[#allocation7 + $0x298] sm:$0xff]
    %v201 = vld [vmem:[#allocation7 + $0x2a0] sm:$0xff]
    %v202 = vld [vmem:[#allocation7 + $0x2a8] sm:$0xff]
    %v203 = vld [vmem:[#allocation7 + $0x2b0] sm:$0xff]
    %v204 = vld [vmem:[#allocation7 + $0x2b8] sm:$0xff]
    %v205 = vld [vmem:[#allocation7 + $0x2c0] sm:$0xff]
    %v206 = vld [vmem:[#allocation7 + $0x2c8] sm:$0xff]
    %v207 = vld [vmem:[#allocation7 + $0x2d0] sm:$0xff]
    %v208 = vld [vmem:[#allocation7 + $0x2d8] sm:$0xff]
    %v209 = vld [vmem:[#allocation7 + $0x2e0] sm:$0xff]
    %v210 = vld [vmem:[#allocation7 + $0x2e8] sm:$0xff]
    %v211 = vld [vmem:[#allocation7 + $0x2f0] sm:$0xff]
    %v212 = vld [vmem:[#allocation7 + $0x2f8] sm:$0xff]
    %v213 = vld [vmem:[#allocation7 + $0x300] sm:$0xff]
    %v214 = vld [vmem:[#allocation7 + $0x308] sm:$0xff]
    %v215 = vld [vmem:[#allocation7 + $0x310] sm:$0xff]
    %v216 = vld [vmem:[#allocation7 + $0x318] sm:$0xff]
    %v217 = vld [vmem:[#allocation7 + $0x320] sm:$0xff]
    %v218 = vld [vmem:[#allocation7 + $0x328] sm:$0xff]
    %v219 = vld [vmem:[#allocation7 + $0x330] sm:$0xff]
    %v220 = vld [vmem:[#allocation7 + $0x338] sm:$0xff]
    %v221 = vld [vmem:[#allocation7 + $0x340] sm:$0xff]
    %v222 = vld [vmem:[#allocation7 + $0x348] sm:$0xff]
    %v223 = vld [vmem:[#allocation7 + $0x350] sm:$0xff]
    %v224 = vld [vmem:[#allocation7 + $0x358] sm:$0xff]
    %v225 = vld [vmem:[#allocation7 + $0x360] sm:$0xff]
    %v226 = vld [vmem:[#allocation7 + $0x368] sm:$0xff]
    %v227 = vld [vmem:[#allocation7 + $0x370] sm:$0xff]
    %v228 = vld [vmem:[#allocation7 + $0x378] sm:$0xff]
    %v229 = vld [vmem:[#allocation7 + $0x380] sm:$0xff]
    %v230 = vld [vmem:[#allocation7 + $0x388] sm:$0xff]
    %v231 = vld [vmem:[#allocation7 + $0x390] sm:$0xff]
    %v232 = vld [vmem:[#allocation7 + $0x398] sm:$0xff]
    %v233 = vld [vmem:[#allocation7 + $0x3a0] sm:$0xff]
    %v234 = vld [vmem:[#allocation7 + $0x3a8] sm:$0xff]
    %v235 = vld [vmem:[#allocation7 + $0x3b0] sm:$0xff]
    %v236 = vld [vmem:[#allocation7 + $0x3b8] sm:$0xff]
    %v237 = vld [vmem:[#allocation7 + $0x3c0] sm:$0xff]
    %v238 = vld [vmem:[#allocation7 + $0x3c8] sm:$0xff]
    %v239 = vld [vmem:[#allocation7 + $0x3d0] sm:$0xff]
    %v240 = vld [vmem:[#allocation7 + $0x3d8] sm:$0xff]
    %v241 = vld [vmem:[#allocation7 + $0x3e0] sm:$0xff]
    %v242 = vld [vmem:[#allocation7 + $0x3e8] sm:$0xff]
    %v243 = vld [vmem:[#allocation7 + $0x3f0] sm:$0xff]
    %v244 = vld [vmem:[#allocation7 + $0x3f8] sm:$0xff]
    %v245 = vld [vmem:[#allocation7 + $0x400] sm:$0xff]
    %v246 = vld [vmem:[#allocation7 + $0x408] sm:$0xff]
    %v247 = vld [vmem:[#allocation7 + $0x410] sm:$0xff]
    %v248 = vld [vmem:[#allocation7 + $0x418] sm:$0xff]
    %v249 = vld [vmem:[#allocation7 + $0x420] sm:$0xff]
    %v250 = vld [vmem:[#allocation7 + $0x428] sm:$0xff]
    %v251 = vld [vmem:[#allocation7 + $0x430] sm:$0xff]
    %v252 = vld [vmem:[#allocation7 + $0x438] sm:$0xff]
    %v253 = vld [vmem:[#allocation7 + $0x440] sm:$0xff]
    %v254 = vld [vmem:[#allocation7 + $0x448] sm:$0xff]
    %v255 = vld [vmem:[#allocation7 + $0x450] sm:$0xff]
    %v256 = vld [vmem:[#allocation7 + $0x458] sm:$0xff]
    %v257 = vld [vmem:[#allocation7 + $0x460] sm:$0xff]
    %v258 = vld [vmem:[#allocation7 + $0x468] sm:$0xff]
    %v259 = vld [vmem:[#allocation7 + $0x470] sm:$0xff]
    %v260 = vld [vmem:[#allocation7 + $0x478] sm:$0xff]
    %v261 = vld [vmem:[#allocation7 + $0x480] sm:$0xff]
    %v262 = vld [vmem:[#allocation7 + $0x488] sm:$0xff]
    %v263 = vld [vmem:[#allocation7 + $0x490] sm:$0xff]
    %v264 = vld [vmem:[#allocation7 + $0x498] sm:$0xff]
    %v265 = vld [vmem:[#allocation7 + $0x4a0] sm:$0xff]
    %v266 = vld [vmem:[#allocation7 + $0x4a8] sm:$0xff]
    %v267 = vld [vmem:[#allocation7 + $0x4b0] sm:$0xff]
    %v268 = vld [vmem:[#allocation7 + $0x4b8] sm:$0xff]
    %v269 = vld [vmem:[#allocation7 + $0x4c0] sm:$0xff]
    %v270 = vld [vmem:[#allocation7 + $0x4c8] sm:$0xff]
    %v271 = vld [vmem:[#allocation7 + $0x4d0] sm:$0xff]
    %v272 = vld [vmem:[#allocation7 + $0x4d8] sm:$0xff]
    %v273 = vld [vmem:[#allocation7 + $0x4e0] sm:$0xff]
    %v274 = vld [vmem:[#allocation7 + $0x4e8] sm:$0xff]
    %v275 = vld [vmem:[#allocation7 + $0x4f0] sm:$0xff]
    %v276 = vld [vmem:[#allocation7 + $0x4f8] sm:$0xff]
    %v277 = vld [vmem:[#allocation7 + $0x500] sm:$0xff]
    %v278 = vld [vmem:[#allocation7 + $0x508] sm:$0xff]
    %v279 = vld [vmem:[#allocation7 + $0x510] sm:$0xff]
    %v280 = vld [vmem:[#allocation7 + $0x518] sm:$0xff]
    %v281 = vld [vmem:[#allocation7 + $0x520] sm:$0xff]
    %v282 = vld [vmem:[#allocation7 + $0x528] sm:$0xff]
    %v283 = vld [vmem:[#allocation7 + $0x530] sm:$0xff]
    %v284 = vld [vmem:[#allocation7 + $0x538] sm:$0xff]
    %v285 = vld [vmem:[#allocation7 + $0x540] sm:$0xff]
    %v286 = vld [vmem:[#allocation7 + $0x548] sm:$0xff]
    %v287 = vld [vmem:[#allocation7 + $0x550] sm:$0xff]
    %v288 = vld [vmem:[#allocation7 + $0x558] sm:$0xff]
    %v289 = vld [vmem:[#allocation7 + $0x560] sm:$0xff]
    %v290 = vld [vmem:[#allocation7 + $0x568] sm:$0xff]
    %v291 = vld [vmem:[#allocation7 + $0x570] sm:$0xff]
    %v292 = vld [vmem:[#allocation7 + $0x578] sm:$0xff]
    %v293 = vld [vmem:[#allocation7 + $0x580] sm:$0xff]
    %v294 = vld [vmem:[#allocation7 + $0x588] sm:$0xff]
    %v295 = vld [vmem:[#allocation7 + $0x590] sm:$0xff]
    %v296 = vld [vmem:[#allocation7 + $0x598] sm:$0xff]
    %v297 = vld [vmem:[#allocation7 + $0x5a0] sm:$0xff]
    %v298 = vld [vmem:[#allocation7 + $0x5a8] sm:$0xff]
    %v299 = vld [vmem:[#allocation7 + $0x5b0] sm:$0xff]
    %v300 = vld [vmem:[#allocation7 + $0x5b8] sm:$0xff]
    %v301 = vld [vmem:[#allocation7 + $0x5c0] sm:$0xff]
    %v302 = vld [vmem:[#allocation7 + $0x5c8] sm:$0xff]
    %v303 = vld [vmem:[#allocation7 + $0x5d0] sm:$0xff]
    %v304 = vld [vmem:[#allocation7 + $0x5d8] sm:$0xff]
    %v305 = vld [vmem:[#allocation7 + $0x5e0] sm:$0xff]
    %v306 = vld [vmem:[#allocation7 + $0x5e8] sm:$0xff]
    %v307 = vld [vmem:[#allocation7 + $0x5f0] sm:$0xff]
    %v308 = vld [vmem:[#allocation7 + $0x5f8] sm:$0xff]
    %v309 = vld [vmem:[#allocation8] sm:$0x7]
    %v310 = vld [vmem:[#allocation10] sm:$0x7]
    %v311 = vld [vmem:[%s6] sm:$0x1]
    %v313 = vperm.slane %v116, 0
    %v314 = vperm.slane %v116, 1
    %v315 = vperm.slane %v116, 2
    %v316 = vperm.slane %v116, 3
    %vm321 = vcmask 162816
    %v323 = vsel %vm321, %v103, 0
    %vm325 = vcmask 1043456
    %v327 = vsel %vm325, %v112, 0
    %v330 = vsel %vm325, %v113, 0
    %v333 = vsel %vm325, %v114, 0
    %v336 = vsel %vm325, %v115, 0
    %338 = vmatpush.msra.mxu0 0.0
    %339 = vmatpush.msra.mxu0 0.0
    %340 = vmatpush.msra.mxu0 0.0
    %341 = vmatpush.msra.mxu0 0.0
    %342 = vmatpush.msra.mxu0 0.0
    %343 = vmatpush.msra.mxu0 0.0
    %344 = vmatpush.msra.mxu0 0.0
    %345 = vmatpush.msra.mxu0 0.0
    %346 = vmatpush.msra.mxu0 0.0
    %347 = vmatpush.msra.mxu0 0.0
    %348 = vmatpush.msra.mxu0 0.0
    %349 = vmatpush.msra.mxu0 0.0
    %350 = vmatpush.msra.mxu0 0.0
    %351 = vmatpush.msra.mxu0 %v327
    %352 = vmatpush.msra.mxu0 %v108
    %353 = vmatpush.msra.mxu0 %v104
    %354 = vmatmul.f32.gmra.mxu0 %v323
    %v355 = vpop.f32.mrf.mxu0
    %v356 = vadd.f32 %v313, %v355
    %357 = vdwg.mxu0
    %358 = vmatpush.msra.mxu0 0.0
    %359 = vmatpush.msra.mxu0 0.0
    %360 = vmatpush.msra.mxu0 0.0
    %361 = vmatpush.msra.mxu0 0.0
    %362 = vmatpush.msra.mxu0 0.0
    %363 = vmatpush.msra.mxu0 0.0
    %364 = vmatpush.msra.mxu0 0.0
    %365 = vmatpush.msra.mxu0 0.0
    %366 = vmatpush.msra.mxu0 0.0
    %367 = vmatpush.msra.mxu0 0.0
    %368 = vmatpush.msra.mxu0 0.0
    %369 = vmatpush.msra.mxu0 0.0
    %370 = vmatpush.msra.mxu0 0.0
    %371 = vmatpush.msra.mxu0 %v330
    %372 = vmatpush.msra.mxu0 %v109
    %373 = vmatpush.msra.mxu0 %v105
    %374 = vmatmul.f32.gmra.mxu0 %v323
    %v375 = vpop.f32.mrf.mxu0
    %v376 = vadd.f32 %v314, %v375
    %377 = vdwg.mxu0
    %378 = vmatpush.msra.mxu0 0.0
    %379 = vmatpush.msra.mxu0 0.0
    %380 = vmatpush.msra.mxu0 0.0
    %381 = vmatpush.msra.mxu0 0.0
    %382 = vmatpush.msra.mxu0 0.0
    %383 = vmatpush.msra.mxu0 0.0
    %384 = vmatpush.msra.mxu0 0.0
    %385 = vmatpush.msra.mxu0 0.0
    %386 = vmatpush.msra.mxu0 0.0
    %387 = vmatpush.msra.mxu0 0.0
    %388 = vmatpush.msra.mxu0 0.0
    %389 = vmatpush.msra.mxu0 0.0
    %390 = vmatpush.msra.mxu0 0.0
    %391 = vmatpush.msra.mxu0 %v333
    %392 = vmatpush.msra.mxu0 %v110
    %393 = vmatpush.msra.mxu0 %v106
    %394 = vmatmul.f32.gmra.mxu0 %v323
    %v395 = vpop.f32.mrf.mxu0
    %v396 = vadd.f32 %v315, %v395
    %397 = vdwg.mxu0
    %398 = vmatpush.msra.mxu0 0.0
    %399 = vmatpush.msra.mxu0 0.0
    %400 = vmatpush.msra.mxu0 0.0
    %401 = vmatpush.msra.mxu0 0.0
    %402 = vmatpush.msra.mxu0 0.0
    %403 = vmatpush.msra.mxu0 0.0
    %404 = vmatpush.msra.mxu0 0.0
    %405 = vmatpush.msra.mxu0 0.0
    %406 = vmatpush.msra.mxu0 0.0
    %407 = vmatpush.msra.mxu0 0.0
    %408 = vmatpush.msra.mxu0 0.0
    %409 = vmatpush.msra.mxu0 0.0
    %410 = vmatpush.msra.mxu0 0.0
    %411 = vmatpush.msra.mxu0 %v336
    %412 = vmatpush.msra.mxu0 %v111
    %413 = vmatpush.msra.mxu0 %v107
    %414 = vmatmul.f32.gmra.mxu0 %v323
    %v415 = vpop.f32.mrf.mxu0
    %v416 = vadd.f32 %v316, %v415
    %417 = vdwg.mxu0
    %v418 = vmax.f32 %v356, 0.0
    %v419 = vmax.f32 %v376, 0.0
    %v420 = vmax.f32 %v396, 0.0
    %v421 = vmax.f32 %v416, 0.0
    %v423 = vperm.slane %v309, 0
    %v424 = vperm.slane %v309, 1
    %v425 = vperm.slane %v309, 2
    %429 = vmatpush.msra.mxu0 %v162
    %430 = vmatpush.msra.mxu0 %v159
    %431 = vmatpush.msra.mxu0 %v156
    %432 = vmatpush.msra.mxu0 %v153
    %433 = vmatpush.msra.mxu0 %v150
    %434 = vmatpush.msra.mxu0 %v147
    %435 = vmatpush.msra.mxu0 %v144
    %436 = vmatpush.msra.mxu0 %v141
    %437 = vmatpush.msra.mxu0 %v138
    %438 = vmatpush.msra.mxu0 %v135
    %439 = vmatpush.msra.mxu0 %v132
    %440 = vmatpush.msra.mxu0 %v129
    %441 = vmatpush.msra.mxu0 %v126
    %442 = vmatpush.msra.mxu0 %v123
    %443 = vmatpush.msra.mxu0 %v120
    %444 = vmatpush.msra.mxu0 %v117
    %445 = vmatmul.f32.gmra.mxu0 %v418
    %v446 = vpop.f32.mrf.mxu0
    %v447 = vadd.f32 %v423, %v446
    %448 = vdwg.mxu0
    %449 = vmatpush.msra.mxu0 %v210
    %450 = vmatpush.msra.mxu0 %v207
    %451 = vmatpush.msra.mxu0 %v204
    %452 = vmatpush.msra.mxu0 %v201
    %453 = vmatpush.msra.mxu0 %v198
    %454 = vmatpush.msra.mxu0 %v195
    %455 = vmatpush.msra.mxu0 %v192
    %456 = vmatpush.msra.mxu0 %v189
    %457 = vmatpush.msra.mxu0 %v186
    %458 = vmatpush.msra.mxu0 %v183
    %459 = vmatpush.msra.mxu0 %v180
    %460 = vmatpush.msra.mxu0 %v177
    %461 = vmatpush.msra.mxu0 %v174
    %462 = vmatpush.msra.mxu0 %v171
    %463 = vmatpush.msra.mxu0 %v168
    %464 = vmatpush.msra.mxu0 %v165
    %465 = vmatmul.f32.gmra.mxu0 %v419
    %v466 = vpop.f32.mrf.mxu0
    %v467 = vadd.f32 %v447, %v466
    %468 = vdwg.mxu0
    %469 = vmatpush.msra.mxu0 %v258
    %470 = vmatpush.msra.mxu0 %v255
    %471 = vmatpush.msra.mxu0 %v252
    %472 = vmatpush.msra.mxu0 %v249
    %473 = vmatpush.msra.mxu0 %v246
    %474 = vmatpush.msra.mxu0 %v243
    %475 = vmatpush.msra.mxu0 %v240
    %476 = vmatpush.msra.mxu0 %v237
    %477 = vmatpush.msra.mxu0 %v234
    %478 = vmatpush.msra.mxu0 %v231
    %479 = vmatpush.msra.mxu0 %v228
    %480 = vmatpush.msra.mxu0 %v225
    %481 = vmatpush.msra.mxu0 %v222
    %482 = vmatpush.msra.mxu0 %v219
    %483 = vmatpush.msra.mxu0 %v216
    %484 = vmatpush.msra.mxu0 %v213
    %485 = vmatmul.f32.gmra.mxu0 %v420
    %v486 = vpop.f32.mrf.mxu0
    %v487 = vadd.f32 %v467, %v486
    %488 = vdwg.mxu0
    %489 = vmatpush.msra.mxu0 %v306
    %490 = vmatpush.msra.mxu0 %v303
    %491 = vmatpush.msra.mxu0 %v300
    %492 = vmatpush.msra.mxu0 %v297
    %493 = vmatpush.msra.mxu0 %v294
    %494 = vmatpush.msra.mxu0 %v291
    %495 = vmatpush.msra.mxu0 %v288
    %496 = vmatpush.msra.mxu0 %v285
    %497 = vmatpush.msra.mxu0 %v282
    %498 = vmatpush.msra.mxu0 %v279
    %499 = vmatpush.msra.mxu0 %v276
    %500 = vmatpush.msra.mxu0 %v273
    %501 = vmatpush.msra.mxu0 %v270
    %502 = vmatpush.msra.mxu0 %v267
    %503 = vmatpush.msra.mxu0 %v264
    %504 = vmatpush.msra.mxu0 %v261
    %505 = vmatmul.f32.gmra.mxu0 %v421
    %v506 = vpop.f32.mrf.mxu0
    %v507 = vadd.f32 %v487, %v506
    %508 = vdwg.mxu0
    %509 = vmatpush.msra.mxu0 %v163
    %510 = vmatpush.msra.mxu0 %v160
    %511 = vmatpush.msra.mxu0 %v157
    %512 = vmatpush.msra.mxu0 %v154
    %513 = vmatpush.msra.mxu0 %v151
    %514 = vmatpush.msra.mxu0 %v148
    %515 = vmatpush.msra.mxu0 %v145
    %516 = vmatpush.msra.mxu0 %v142
    %517 = vmatpush.msra.mxu0 %v139
    %518 = vmatpush.msra.mxu0 %v136
    %519 = vmatpush.msra.mxu0 %v133
    %520 = vmatpush.msra.mxu0 %v130
    %521 = vmatpush.msra.mxu0 %v127
    %522 = vmatpush.msra.mxu0 %v124
    %523 = vmatpush.msra.mxu0 %v121
    %524 = vmatpush.msra.mxu0 %v118
    %525 = vmatmul.f32.gmra.mxu0 %v418
    %v526 = vpop.f32.mrf.mxu0
    %v527 = vadd.f32 %v424, %v526
    %528 = vdwg.mxu0
    %529 = vmatpush.msra.mxu0 %v211
    %530 = vmatpush.msra.mxu0 %v208
    %531 = vmatpush.msra.mxu0 %v205
    %532 = vmatpush.msra.mxu0 %v202
    %533 = vmatpush.msra.mxu0 %v199
    %534 = vmatpush.msra.mxu0 %v196
    %535 = vmatpush.msra.mxu0 %v193
    %536 = vmatpush.msra.mxu0 %v190
    %537 = vmatpush.msra.mxu0 %v187
    %538 = vmatpush.msra.mxu0 %v184
    %539 = vmatpush.msra.mxu0 %v181
    %540 = vmatpush.msra.mxu0 %v178
    %541 = vmatpush.msra.mxu0 %v175
    %542 = vmatpush.msra.mxu0 %v172
    %543 = vmatpush.msra.mxu0 %v169
    %544 = vmatpush.msra.mxu0 %v166
    %545 = vmatmul.f32.gmra.mxu0 %v419
    %v546 = vpop.f32.mrf.mxu0
    %v547 = vadd.f32 %v527, %v546
    %548 = vdwg.mxu0
    %549 = vmatpush.msra.mxu0 %v259
    %550 = vmatpush.msra.mxu0 %v256
    %551 = vmatpush.msra.mxu0 %v253
    %552 = vmatpush.msra.mxu0 %v250
    %553 = vmatpush.msra.mxu0 %v247
    %554 = vmatpush.msra.mxu0 %v244
    %555 = vmatpush.msra.mxu0 %v241
    %556 = vmatpush.msra.mxu0 %v238
    %557 = vmatpush.msra.mxu0 %v235
    %558 = vmatpush.msra.mxu0 %v232
    %559 = vmatpush.msra.mxu0 %v229
    %560 = vmatpush.msra.mxu0 %v226
    %561 = vmatpush.msra.mxu0 %v223
    %562 = vmatpush.msra.mxu0 %v220
    %563 = vmatpush.msra.mxu0 %v217
    %564 = vmatpush.msra.mxu0 %v214
    %565 = vmatmul.f32.gmra.mxu0 %v420
    %v566 = vpop.f32.mrf.mxu0
    %v567 = vadd.f32 %v547, %v566
    %568 = vdwg.mxu0
    %569 = vmatpush.msra.mxu0 %v307
    %570 = vmatpush.msra.mxu0 %v304
    %571 = vmatpush.msra.mxu0 %v301
    %572 = vmatpush.msra.mxu0 %v298
    %573 = vmatpush.msra.mxu0 %v295
    %574 = vmatpush.msra.mxu0 %v292
    %575 = vmatpush.msra.mxu0 %v289
    %576 = vmatpush.msra.mxu0 %v286
    %577 = vmatpush.msra.mxu0 %v283
    %578 = vmatpush.msra.mxu0 %v280
    %579 = vmatpush.msra.mxu0 %v277
    %580 = vmatpush.msra.mxu0 %v274
    %581 = vmatpush.msra.mxu0 %v271
    %582 = vmatpush.msra.mxu0 %v268
    %583 = vmatpush.msra.mxu0 %v265
    %584 = vmatpush.msra.mxu0 %v262
    %585 = vmatmul.f32.gmra.mxu0 %v421
    %v586 = vpop.f32.mrf.mxu0
    %v587 = vadd.f32 %v567, %v586
    %588 = vdwg.mxu0
    %589 = vmatpush.msra.mxu0 %v164
    %590 = vmatpush.msra.mxu0 %v161
    %591 = vmatpush.msra.mxu0 %v158
    %592 = vmatpush.msra.mxu0 %v155
    %593 = vmatpush.msra.mxu0 %v152
    %594 = vmatpush.msra.mxu0 %v149
    %595 = vmatpush.msra.mxu0 %v146
    %596 = vmatpush.msra.mxu0 %v143
    %597 = vmatpush.msra.mxu0 %v140
    %598 = vmatpush.msra.mxu0 %v137
    %599 = vmatpush.msra.mxu0 %v134
    %600 = vmatpush.msra.mxu0 %v131
    %601 = vmatpush.msra.mxu0 %v128
    %602 = vmatpush.msra.mxu0 %v125
    %603 = vmatpush.msra.mxu0 %v122
    %604 = vmatpush.msra.mxu0 %v119
    %605 = vmatmul.f32.gmra.mxu0 %v418
    %v606 = vpop.f32.mrf.mxu0
    %v607 = vadd.f32 %v425, %v606
    %608 = vdwg.mxu0
    %609 = vmatpush.msra.mxu0 %v212
    %610 = vmatpush.msra.mxu0 %v209
    %611 = vmatpush.msra.mxu0 %v206
    %612 = vmatpush.msra.mxu0 %v203
    %613 = vmatpush.msra.mxu0 %v200
    %614 = vmatpush.msra.mxu0 %v197
    %615 = vmatpush.msra.mxu0 %v194
    %616 = vmatpush.msra.mxu0 %v191
    %617 = vmatpush.msra.mxu0 %v188
    %618 = vmatpush.msra.mxu0 %v185
    %619 = vmatpush.msra.mxu0 %v182
    %620 = vmatpush.msra.mxu0 %v179
    %621 = vmatpush.msra.mxu0 %v176
    %622 = vmatpush.msra.mxu0 %v173
    %623 = vmatpush.msra.mxu0 %v170
    %624 = vmatpush.msra.mxu0 %v167
    %625 = vmatmul.f32.gmra.mxu0 %v419
    %v626 = vpop.f32.mrf.mxu0
    %v627 = vadd.f32 %v607, %v626
    %628 = vdwg.mxu0
    %629 = vmatpush.msra.mxu0 %v260
    %630 = vmatpush.msra.mxu0 %v257
    %631 = vmatpush.msra.mxu0 %v254
    %632 = vmatpush.msra.mxu0 %v251
    %633 = vmatpush.msra.mxu0 %v248
    %634 = vmatpush.msra.mxu0 %v245
    %635 = vmatpush.msra.mxu0 %v242
    %636 = vmatpush.msra.mxu0 %v239
    %637 = vmatpush.msra.mxu0 %v236
    %638 = vmatpush.msra.mxu0 %v233
    %639 = vmatpush.msra.mxu0 %v230
    %640 = vmatpush.msra.mxu0 %v227
    %641 = vmatpush.msra.mxu0 %v224
    %642 = vmatpush.msra.mxu0 %v221
    %643 = vmatpush.msra.mxu0 %v218
    %644 = vmatpush.msra.mxu0 %v215
    %645 = vmatmul.f32.gmra.mxu0 %v420
    %v646 = vpop.f32.mrf.mxu0
    %v647 = vadd.f32 %v627, %v646
    %648 = vdwg.mxu0
    %649 = vmatpush.msra.mxu0 %v308
    %650 = vmatpush.msra.mxu0 %v305
    %651 = vmatpush.msra.mxu0 %v302
    %652 = vmatpush.msra.mxu0 %v299
    %653 = vmatpush.msra.mxu0 %v296
    %654 = vmatpush.msra.mxu0 %v293
    %655 = vmatpush.msra.mxu0 %v290
    %656 = vmatpush.msra.mxu0 %v287
    %657 = vmatpush.msra.mxu0 %v284
    %658 = vmatpush.msra.mxu0 %v281
    %659 = vmatpush.msra.mxu0 %v278
    %660 = vmatpush.msra.mxu0 %v275
    %661 = vmatpush.msra.mxu0 %v272
    %662 = vmatpush.msra.mxu0 %v269
    %663 = vmatpush.msra.mxu0 %v266
    %664 = vmatpush.msra.mxu0 %v263
    %665 = vmatmul.f32.gmra.mxu0 %v421
    %v666 = vpop.f32.mrf.mxu0
    %v667 = vadd.f32 %v647, %v666
    %668 = vdwg.mxu0
    %v669 = vmax.f32 %v507, 0.0
    %v670 = vmax.f32 %v587, 0.0
    %v671 = vmax.f32 %v667, 0.0
    %673 = vset.pattern.permute.xlu0 0
    %674 = vperm.xlu0 %673, %v311
    %v675 = vpop.permute.xlu0 %674
    %v677 = vperm.slane %v675, 0
    %v679 = vperm.slane %v310, 0
    %v680 = vperm.slane %v310, 1
    %v681 = vperm.slane %v310, 2
    %685 = vmatpush.xpose.msra.mxu0 0.0
    %686 = vmatpush.xpose.msra.mxu0 0.0
    %687 = vmatpush.xpose.msra.mxu0 0.0
    %688 = vmatpush.xpose.msra.mxu0 0.0
    %689 = vmatpush.xpose.msra.mxu0 0.0
    %690 = vmatpush.xpose.msra.mxu0 0.0
    %691 = vmatpush.xpose.msra.mxu0 0.0
    %692 = vmatpush.xpose.msra.mxu0 0.0
    %693 = vmatpush.xpose.msra.mxu0 0.0
    %694 = vmatpush.xpose.msra.mxu0 0.0
    %695 = vmatpush.xpose.msra.mxu0 0.0
    %696 = vmatpush.xpose.msra.mxu0 0.0
    %697 = vmatpush.xpose.msra.mxu0 0.0
    %698 = vmatpush.xpose.msra.mxu0 0.0
    %699 = vmatpush.xpose.msra.mxu0 0.0
    %700 = vmatpush.xpose.msra.mxu0 %v669
    %701 = vmatmul.f32.gmra.mxu0 %v679
    %v702 = vpop.f32.mrf.mxu0
    %v703 = vadd.f32 %v677, %v702
    %704 = vdwg.mxu0
    %705 = vmatpush.xpose.msra.mxu0 0.0
    %706 = vmatpush.xpose.msra.mxu0 0.0
    %707 = vmatpush.xpose.msra.mxu0 0.0
    %708 = vmatpush.xpose.msra.mxu0 0.0
    %709 = vmatpush.xpose.msra.mxu0 0.0
    %710 = vmatpush.xpose.msra.mxu0 0.0
    %711 = vmatpush.xpose.msra.mxu0 0.0
    %712 = vmatpush.xpose.msra.mxu0 0.0
    %713 = vmatpush.xpose.msra.mxu0 0.0
    %714 = vmatpush.xpose.msra.mxu0 0.0
    %715 = vmatpush.xpose.msra.mxu0 0.0
    %716 = vmatpush.xpose.msra.mxu0 0.0
    %717 = vmatpush.xpose.msra.mxu0 0.0
    %718 = vmatpush.xpose.msra.mxu0 0.0
    %719 = vmatpush.xpose.msra.mxu0 0.0
    %720 = vmatpush.xpose.msra.mxu0 %v670
    %721 = vmatmul.f32.gmra.mxu0 %v680
    %v722 = vpop.f32.mrf.mxu0
    %v723 = vadd.f32 %v703, %v722
    %724 = vdwg.mxu0
    %725 = vmatpush.xpose.msra.mxu0 0.0
    %726 = vmatpush.xpose.msra.mxu0 0.0
    %727 = vmatpush.xpose.msra.mxu0 0.0
    %728 = vmatpush.xpose.msra.mxu0 0.0
    %729 = vmatpush.xpose.msra.mxu0 0.0
    %730 = vmatpush.xpose.msra.mxu0 0.0
    %731 = vmatpush.xpose.msra.mxu0 0.0
    %732 = vmatpush.xpose.msra.mxu0 0.0
    %733 = vmatpush.xpose.msra.mxu0 0.0
    %734 = vmatpush.xpose.msra.mxu0 0.0
    %735 = vmatpush.xpose.msra.mxu0 0.0
    %736 = vmatpush.xpose.msra.mxu0 0.0
    %737 = vmatpush.xpose.msra.mxu0 0.0
    %738 = vmatpush.xpose.msra.mxu0 0.0
    %739 = vmatpush.xpose.msra.mxu0 0.0
    %740 = vmatpush.xpose.msra.mxu0 %v671
    %741 = vmatmul.f32.gmra.mxu0 %v681
    %v742 = vpop.f32.mrf.mxu0
    %v743 = vadd.f32 %v723, %v742
    %744 = vdwg.mxu0
    %vm745 = vcmask 57344
    %746 = vst.msk [vmem:[#allocation11] sm:$0x1] %vm745, %v743
    %s747 = scalar_lea.vmem %s1, 96
    %v748 = vld [vmem:[%s747] sm:$0xff]
    %v749 = vld [vmem:[%s747 + $0x8] sm:$0xff]
    %v750 = vld [vmem:[%s747 + $0x10] sm:$0xff]
    %v751 = vld [vmem:[%s747 + $0x18] sm:$0xff]
    %v752 = vld [vmem:[%s747 + $0x20] sm:$0xff]
    %v753 = vld [vmem:[%s747 + $0x28] sm:$0xff]
    %v754 = vld [vmem:[%s747 + $0x30] sm:$0xff]
    %v755 = vld [vmem:[%s747 + $0x38] sm:$0xff]
    %v756 = vld [vmem:[%s747 + $0x40] sm:$0xf]
    %v757 = vld [vmem:[%s747 + $0x48] sm:$0xf]
    %v758 = vld [vmem:[%s747 + $0x50] sm:$0xf]
    %v759 = vld [vmem:[%s747 + $0x58] sm:$0xf]
    %s760 = scalar_lea.vmem [#allocation5], 4
    %v761 = vld [vmem:[%s760] sm:$0xf]
    %s762 = scalar_lea.vmem [#allocation7], 1536
    %v763 = vld [vmem:[%s762] sm:$0xff]
    %v764 = vld [vmem:[%s762 + $0x8] sm:$0xff]
    %v765 = vld [vmem:[%s762 + $0x10] sm:$0xff]
    %v766 = vld [vmem:[%s762 + $0x18] sm:$0xff]
    %v767 = vld [vmem:[%s762 + $0x20] sm:$0xff]
    %v768 = vld [vmem:[%s762 + $0x28] sm:$0xff]
    %v769 = vld [vmem:[%s762 + $0x30] sm:$0xff]
    %v770 = vld [vmem:[%s762 + $0x38] sm:$0xff]
    %v771 = vld [vmem:[%s762 + $0x40] sm:$0xff]
    %v772 = vld [vmem:[%s762 + $0x48] sm:$0xff]
    %v773 = vld [vmem:[%s762 + $0x50] sm:$0xff]
    %v774 = vld [vmem:[%s762 + $0x58] sm:$0xff]
    %v775 = vld [vmem:[%s762 + $0x60] sm:$0xff]
    %v776 = vld [vmem:[%s762 + $0x68] sm:$0xff]
    %v777 = vld [vmem:[%s762 + $0x70] sm:$0xff]
    %v778 = vld [vmem:[%s762 + $0x78] sm:$0xff]
    %v779 = vld [vmem:[%s762 + $0x80] sm:$0xff]
    %v780 = vld [vmem:[%s762 + $0x88] sm:$0xff]
    %v781 = vld [vmem:[%s762 + $0x90] sm:$0xff]
    %v782 = vld [vmem:[%s762 + $0x98] sm:$0xff]
    %v783 = vld [vmem:[%s762 + $0xa0] sm:$0xff]
    %v784 = vld [vmem:[%s762 + $0xa8] sm:$0xff]
    %v785 = vld [vmem:[%s762 + $0xb0] sm:$0xff]
    %v786 = vld [vmem:[%s762 + $0xb8] sm:$0xff]
    %v787 = vld [vmem:[%s762 + $0xc0] sm:$0xff]
    %v788 = vld [vmem:[%s762 + $0xc8] sm:$0xff]
    %v789 = vld [vmem:[%s762 + $0xd0] sm:$0xff]
    %v790 = vld [vmem:[%s762 + $0xd8] sm:$0xff]
    %v791 = vld [vmem:[%s762 + $0xe0] sm:$0xff]
    %v792 = vld [vmem:[%s762 + $0xe8] sm:$0xff]
    %v793 = vld [vmem:[%s762 + $0xf0] sm:$0xff]
    %v794 = vld [vmem:[%s762 + $0xf8] sm:$0xff]
    %v795 = vld [vmem:[%s762 + $0x100] sm:$0xff]
    %v796 = vld [vmem:[%s762 + $0x108] sm:$0xff]
    %v797 = vld [vmem:[%s762 + $0x110] sm:$0xff]
    %v798 = vld [vmem:[%s762 + $0x118] sm:$0xff]
    %v799 = vld [vmem:[%s762 + $0x120] sm:$0xff]
    %v800 = vld [vmem:[%s762 + $0x128] sm:$0xff]
    %v801 = vld [vmem:[%s762 + $0x130] sm:$0xff]
    %v802 = vld [vmem:[%s762 + $0x138] sm:$0xff]
    %v803 = vld [vmem:[%s762 + $0x140] sm:$0xff]
    %v804 = vld [vmem:[%s762 + $0x148] sm:$0xff]
    %v805 = vld [vmem:[%s762 + $0x150] sm:$0xff]
    %v806 = vld [vmem:[%s762 + $0x158] sm:$0xff]
    %v807 = vld [vmem:[%s762 + $0x160] sm:$0xff]
    %v808 = vld [vmem:[%s762 + $0x168] sm:$0xff]
    %v809 = vld [vmem:[%s762 + $0x170] sm:$0xff]
    %v810 = vld [vmem:[%s762 + $0x178] sm:$0xff]
    %v811 = vld [vmem:[%s762 + $0x180] sm:$0xff]
    %v812 = vld [vmem:[%s762 + $0x188] sm:$0xff]
    %v813 = vld [vmem:[%s762 + $0x190] sm:$0xff]
    %v814 = vld [vmem:[%s762 + $0x198] sm:$0xff]
    %v815 = vld [vmem:[%s762 + $0x1a0] sm:$0xff]
    %v816 = vld [vmem:[%s762 + $0x1a8] sm:$0xff]
    %v817 = vld [vmem:[%s762 + $0x1b0] sm:$0xff]
    %v818 = vld [vmem:[%s762 + $0x1b8] sm:$0xff]
    %v819 = vld [vmem:[%s762 + $0x1c0] sm:$0xff]
    %v820 = vld [vmem:[%s762 + $0x1c8] sm:$0xff]
    %v821 = vld [vmem:[%s762 + $0x1d0] sm:$0xff]
    %v822 = vld [vmem:[%s762 + $0x1d8] sm:$0xff]
    %v823 = vld [vmem:[%s762 + $0x1e0] sm:$0xff]
    %v824 = vld [vmem:[%s762 + $0x1e8] sm:$0xff]
    %v825 = vld [vmem:[%s762 + $0x1f0] sm:$0xff]
    %v826 = vld [vmem:[%s762 + $0x1f8] sm:$0xff]
    %v827 = vld [vmem:[%s762 + $0x200] sm:$0xff]
    %v828 = vld [vmem:[%s762 + $0x208] sm:$0xff]
    %v829 = vld [vmem:[%s762 + $0x210] sm:$0xff]
    %v830 = vld [vmem:[%s762 + $0x218] sm:$0xff]
    %v831 = vld [vmem:[%s762 + $0x220] sm:$0xff]
    %v832 = vld [vmem:[%s762 + $0x228] sm:$0xff]
    %v833 = vld [vmem:[%s762 + $0x230] sm:$0xff]
    %v834 = vld [vmem:[%s762 + $0x238] sm:$0xff]
    %v835 = vld [vmem:[%s762 + $0x240] sm:$0xff]
    %v836 = vld [vmem:[%s762 + $0x248] sm:$0xff]
    %v837 = vld [vmem:[%s762 + $0x250] sm:$0xff]
    %v838 = vld [vmem:[%s762 + $0x258] sm:$0xff]
    %v839 = vld [vmem:[%s762 + $0x260] sm:$0xff]
    %v840 = vld [vmem:[%s762 + $0x268] sm:$0xff]
    %v841 = vld [vmem:[%s762 + $0x270] sm:$0xff]
    %v842 = vld [vmem:[%s762 + $0x278] sm:$0xff]
    %v843 = vld [vmem:[%s762 + $0x280] sm:$0xff]
    %v844 = vld [vmem:[%s762 + $0x288] sm:$0xff]
    %v845 = vld [vmem:[%s762 + $0x290] sm:$0xff]
    %v846 = vld [vmem:[%s762 + $0x298] sm:$0xff]
    %v847 = vld [vmem:[%s762 + $0x2a0] sm:$0xff]
    %v848 = vld [vmem:[%s762 + $0x2a8] sm:$0xff]
    %v849 = vld [vmem:[%s762 + $0x2b0] sm:$0xff]
    %v850 = vld [vmem:[%s762 + $0x2b8] sm:$0xff]
    %v851 = vld [vmem:[%s762 + $0x2c0] sm:$0xff]
    %v852 = vld [vmem:[%s762 + $0x2c8] sm:$0xff]
    %v853 = vld [vmem:[%s762 + $0x2d0] sm:$0xff]
    %v854 = vld [vmem:[%s762 + $0x2d8] sm:$0xff]
    %v855 = vld [vmem:[%s762 + $0x2e0] sm:$0xff]
    %v856 = vld [vmem:[%s762 + $0x2e8] sm:$0xff]
    %v857 = vld [vmem:[%s762 + $0x2f0] sm:$0xff]
    %v858 = vld [vmem:[%s762 + $0x2f8] sm:$0xff]
    %v859 = vld [vmem:[%s762 + $0x300] sm:$0xff]
    %v860 = vld [vmem:[%s762 + $0x308] sm:$0xff]
    %v861 = vld [vmem:[%s762 + $0x310] sm:$0xff]
    %v862 = vld [vmem:[%s762 + $0x318] sm:$0xff]
    %v863 = vld [vmem:[%s762 + $0x320] sm:$0xff]
    %v864 = vld [vmem:[%s762 + $0x328] sm:$0xff]
    %v865 = vld [vmem:[%s762 + $0x330] sm:$0xff]
    %v866 = vld [vmem:[%s762 + $0x338] sm:$0xff]
    %v867 = vld [vmem:[%s762 + $0x340] sm:$0xff]
    %v868 = vld [vmem:[%s762 + $0x348] sm:$0xff]
    %v869 = vld [vmem:[%s762 + $0x350] sm:$0xff]
    %v870 = vld [vmem:[%s762 + $0x358] sm:$0xff]
    %v871 = vld [vmem:[%s762 + $0x360] sm:$0xff]
    %v872 = vld [vmem:[%s762 + $0x368] sm:$0xff]
    %v873 = vld [vmem:[%s762 + $0x370] sm:$0xff]
    %v874 = vld [vmem:[%s762 + $0x378] sm:$0xff]
    %v875 = vld [vmem:[%s762 + $0x380] sm:$0xff]
    %v876 = vld [vmem:[%s762 + $0x388] sm:$0xff]
    %v877 = vld [vmem:[%s762 + $0x390] sm:$0xff]
    %v878 = vld [vmem:[%s762 + $0x398] sm:$0xff]
    %v879 = vld [vmem:[%s762 + $0x3a0] sm:$0xff]
    %v880 = vld [vmem:[%s762 + $0x3a8] sm:$0xff]
    %v881 = vld [vmem:[%s762 + $0x3b0] sm:$0xff]
    %v882 = vld [vmem:[%s762 + $0x3b8] sm:$0xff]
    %v883 = vld [vmem:[%s762 + $0x3c0] sm:$0xff]
    %v884 = vld [vmem:[%s762 + $0x3c8] sm:$0xff]
    %v885 = vld [vmem:[%s762 + $0x3d0] sm:$0xff]
    %v886 = vld [vmem:[%s762 + $0x3d8] sm:$0xff]
    %v887 = vld [vmem:[%s762 + $0x3e0] sm:$0xff]
    %v888 = vld [vmem:[%s762 + $0x3e8] sm:$0xff]
    %v889 = vld [vmem:[%s762 + $0x3f0] sm:$0xff]
    %v890 = vld [vmem:[%s762 + $0x3f8] sm:$0xff]
    %v891 = vld [vmem:[%s762 + $0x400] sm:$0xff]
    %v892 = vld [vmem:[%s762 + $0x408] sm:$0xff]
    %v893 = vld [vmem:[%s762 + $0x410] sm:$0xff]
    %v894 = vld [vmem:[%s762 + $0x418] sm:$0xff]
    %v895 = vld [vmem:[%s762 + $0x420] sm:$0xff]
    %v896 = vld [vmem:[%s762 + $0x428] sm:$0xff]
    %v897 = vld [vmem:[%s762 + $0x430] sm:$0xff]
    %v898 = vld [vmem:[%s762 + $0x438] sm:$0xff]
    %v899 = vld [vmem:[%s762 + $0x440] sm:$0xff]
    %v900 = vld [vmem:[%s762 + $0x448] sm:$0xff]
    %v901 = vld [vmem:[%s762 + $0x450] sm:$0xff]
    %v902 = vld [vmem:[%s762 + $0x458] sm:$0xff]
    %v903 = vld [vmem:[%s762 + $0x460] sm:$0xff]
    %v904 = vld [vmem:[%s762 + $0x468] sm:$0xff]
    %v905 = vld [vmem:[%s762 + $0x470] sm:$0xff]
    %v906 = vld [vmem:[%s762 + $0x478] sm:$0xff]
    %v907 = vld [vmem:[%s762 + $0x480] sm:$0xff]
    %v908 = vld [vmem:[%s762 + $0x488] sm:$0xff]
    %v909 = vld [vmem:[%s762 + $0x490] sm:$0xff]
    %v910 = vld [vmem:[%s762 + $0x498] sm:$0xff]
    %v911 = vld [vmem:[%s762 + $0x4a0] sm:$0xff]
    %v912 = vld [vmem:[%s762 + $0x4a8] sm:$0xff]
    %v913 = vld [vmem:[%s762 + $0x4b0] sm:$0xff]
    %v914 = vld [vmem:[%s762 + $0x4b8] sm:$0xff]
    %v915 = vld [vmem:[%s762 + $0x4c0] sm:$0xff]
    %v916 = vld [vmem:[%s762 + $0x4c8] sm:$0xff]
    %v917 = vld [vmem:[%s762 + $0x4d0] sm:$0xff]
    %v918 = vld [vmem:[%s762 + $0x4d8] sm:$0xff]
    %v919 = vld [vmem:[%s762 + $0x4e0] sm:$0xff]
    %v920 = vld [vmem:[%s762 + $0x4e8] sm:$0xff]
    %v921 = vld [vmem:[%s762 + $0x4f0] sm:$0xff]
    %v922 = vld [vmem:[%s762 + $0x4f8] sm:$0xff]
    %v923 = vld [vmem:[%s762 + $0x500] sm:$0xff]
    %v924 = vld [vmem:[%s762 + $0x508] sm:$0xff]
    %v925 = vld [vmem:[%s762 + $0x510] sm:$0xff]
    %v926 = vld [vmem:[%s762 + $0x518] sm:$0xff]
    %v927 = vld [vmem:[%s762 + $0x520] sm:$0xff]
    %v928 = vld [vmem:[%s762 + $0x528] sm:$0xff]
    %v929 = vld [vmem:[%s762 + $0x530] sm:$0xff]
    %v930 = vld [vmem:[%s762 + $0x538] sm:$0xff]
    %v931 = vld [vmem:[%s762 + $0x540] sm:$0xff]
    %v932 = vld [vmem:[%s762 + $0x548] sm:$0xff]
    %v933 = vld [vmem:[%s762 + $0x550] sm:$0xff]
    %v934 = vld [vmem:[%s762 + $0x558] sm:$0xff]
    %v935 = vld [vmem:[%s762 + $0x560] sm:$0xff]
    %v936 = vld [vmem:[%s762 + $0x568] sm:$0xff]
    %v937 = vld [vmem:[%s762 + $0x570] sm:$0xff]
    %v938 = vld [vmem:[%s762 + $0x578] sm:$0xff]
    %v939 = vld [vmem:[%s762 + $0x580] sm:$0xff]
    %v940 = vld [vmem:[%s762 + $0x588] sm:$0xff]
    %v941 = vld [vmem:[%s762 + $0x590] sm:$0xff]
    %v942 = vld [vmem:[%s762 + $0x598] sm:$0xff]
    %v943 = vld [vmem:[%s762 + $0x5a0] sm:$0xff]
    %v944 = vld [vmem:[%s762 + $0x5a8] sm:$0xff]
    %v945 = vld [vmem:[%s762 + $0x5b0] sm:$0xff]
    %v946 = vld [vmem:[%s762 + $0x5b8] sm:$0xff]
    %v947 = vld [vmem:[%s762 + $0x5c0] sm:$0xff]
    %v948 = vld [vmem:[%s762 + $0x5c8] sm:$0xff]
    %v949 = vld [vmem:[%s762 + $0x5d0] sm:$0xff]
    %v950 = vld [vmem:[%s762 + $0x5d8] sm:$0xff]
    %v951 = vld [vmem:[%s762 + $0x5e0] sm:$0xff]
    %v952 = vld [vmem:[%s762 + $0x5e8] sm:$0xff]
    %v953 = vld [vmem:[%s762 + $0x5f0] sm:$0xff]
    %v954 = vld [vmem:[%s762 + $0x5f8] sm:$0xff]
    %s955 = scalar_lea.vmem [#allocation8], 3
    %v956 = vld [vmem:[%s955] sm:$0x7]
    %s957 = scalar_lea.vmem [#allocation10], 3
    %v958 = vld [vmem:[%s957] sm:$0x7]
    %s959 = scalar_lea.vmem %s6, 1
    %v960 = vld [vmem:[%s959] sm:$0x1]
    %v962 = vperm.slane %v761, 0
    %v963 = vperm.slane %v761, 1
    %v964 = vperm.slane %v761, 2
    %v965 = vperm.slane %v761, 3
    %v971 = vsel %vm325, %v756, 0
    %v974 = vsel %vm325, %v757, 0
    %v977 = vsel %vm325, %v758, 0
    %v980 = vsel %vm325, %v759, 0
    %982 = vmatpush.msra.mxu0 0.0
    %983 = vmatpush.msra.mxu0 0.0
    %984 = vmatpush.msra.mxu0 0.0
    %985 = vmatpush.msra.mxu0 0.0
    %986 = vmatpush.msra.mxu0 0.0
    %987 = vmatpush.msra.mxu0 0.0
    %988 = vmatpush.msra.mxu0 0.0
    %989 = vmatpush.msra.mxu0 0.0
    %990 = vmatpush.msra.mxu0 0.0
    %991 = vmatpush.msra.mxu0 0.0
    %992 = vmatpush.msra.mxu0 0.0
    %993 = vmatpush.msra.mxu0 0.0
    %994 = vmatpush.msra.mxu0 0.0
    %995 = vmatpush.msra.mxu0 %v971
    %996 = vmatpush.msra.mxu0 %v752
    %997 = vmatpush.msra.mxu0 %v748
    %998 = vmatmul.f32.gmra.mxu0 %v323
    %v999 = vpop.f32.mrf.mxu0
    %v1000 = vadd.f32 %v962, %v999
    %1001 = vdwg.mxu0
    %1002 = vmatpush.msra.mxu0 0.0
    %1003 = vmatpush.msra.mxu0 0.0
    %1004 = vmatpush.msra.mxu0 0.0
    %1005 = vmatpush.msra.mxu0 0.0
    %1006 = vmatpush.msra.mxu0 0.0
    %1007 = vmatpush.msra.mxu0 0.0
    %1008 = vmatpush.msra.mxu0 0.0
    %1009 = vmatpush.msra.mxu0 0.0
    %1010 = vmatpush.msra.mxu0 0.0
    %1011 = vmatpush.msra.mxu0 0.0
    %1012 = vmatpush.msra.mxu0 0.0
    %1013 = vmatpush.msra.mxu0 0.0
    %1014 = vmatpush.msra.mxu0 0.0
    %1015 = vmatpush.msra.mxu0 %v974
    %1016 = vmatpush.msra.mxu0 %v753
    %1017 = vmatpush.msra.mxu0 %v749
    %1018 = vmatmul.f32.gmra.mxu0 %v323
    %v1019 = vpop.f32.mrf.mxu0
    %v1020 = vadd.f32 %v963, %v1019
    %1021 = vdwg.mxu0
    %1022 = vmatpush.msra.mxu0 0.0
    %1023 = vmatpush.msra.mxu0 0.0
    %1024 = vmatpush.msra.mxu0 0.0
    %1025 = vmatpush.msra.mxu0 0.0
    %1026 = vmatpush.msra.mxu0 0.0
    %1027 = vmatpush.msra.mxu0 0.0
    %1028 = vmatpush.msra.mxu0 0.0
    %1029 = vmatpush.msra.mxu0 0.0
    %1030 = vmatpush.msra.mxu0 0.0
    %1031 = vmatpush.msra.mxu0 0.0
    %1032 = vmatpush.msra.mxu0 0.0
    %1033 = vmatpush.msra.mxu0 0.0
    %1034 = vmatpush.msra.mxu0 0.0
    %1035 = vmatpush.msra.mxu0 %v977
    %1036 = vmatpush.msra.mxu0 %v754
    %1037 = vmatpush.msra.mxu0 %v750
    %1038 = vmatmul.f32.gmra.mxu0 %v323
    %v1039 = vpop.f32.mrf.mxu0
    %v1040 = vadd.f32 %v964, %v1039
    %1041 = vdwg.mxu0
    %1042 = vmatpush.msra.mxu0 0.0
    %1043 = vmatpush.msra.mxu0 0.0
    %1044 = vmatpush.msra.mxu0 0.0
    %1045 = vmatpush.msra.mxu0 0.0
    %1046 = vmatpush.msra.mxu0 0.0
    %1047 = vmatpush.msra.mxu0 0.0
    %1048 = vmatpush.msra.mxu0 0.0
    %1049 = vmatpush.msra.mxu0 0.0
    %1050 = vmatpush.msra.mxu0 0.0
    %1051 = vmatpush.msra.mxu0 0.0
    %1052 = vmatpush.msra.mxu0 0.0
    %1053 = vmatpush.msra.mxu0 0.0
    %1054 = vmatpush.msra.mxu0 0.0
    %1055 = vmatpush.msra.mxu0 %v980
    %1056 = vmatpush.msra.mxu0 %v755
    %1057 = vmatpush.msra.mxu0 %v751
    %1058 = vmatmul.f32.gmra.mxu0 %v323
    %v1059 = vpop.f32.mrf.mxu0
    %v1060 = vadd.f32 %v965, %v1059
    %1061 = vdwg.mxu0
    %v1062 = vmax.f32 %v1000, 0.0
    %v1063 = vmax.f32 %v1020, 0.0
    %v1064 = vmax.f32 %v1040, 0.0
    %v1065 = vmax.f32 %v1060, 0.0
    %v1067 = vperm.slane %v956, 0
    %v1068 = vperm.slane %v956, 1
    %v1069 = vperm.slane %v956, 2
    %1073 = vmatpush.msra.mxu0 %v808
    %1074 = vmatpush.msra.mxu0 %v805
    %1075 = vmatpush.msra.mxu0 %v802
    %1076 = vmatpush.msra.mxu0 %v799
    %1077 = vmatpush.msra.mxu0 %v796
    %1078 = vmatpush.msra.mxu0 %v793
    %1079 = vmatpush.msra.mxu0 %v790
    %1080 = vmatpush.msra.mxu0 %v787
    %1081 = vmatpush.msra.mxu0 %v784
    %1082 = vmatpush.msra.mxu0 %v781
    %1083 = vmatpush.msra.mxu0 %v778
    %1084 = vmatpush.msra.mxu0 %v775
    %1085 = vmatpush.msra.mxu0 %v772
    %1086 = vmatpush.msra.mxu0 %v769
    %1087 = vmatpush.msra.mxu0 %v766
    %1088 = vmatpush.msra.mxu0 %v763
    %1089 = vmatmul.f32.gmra.mxu0 %v1062
    %v1090 = vpop.f32.mrf.mxu0
    %v1091 = vadd.f32 %v1067, %v1090
    %1092 = vdwg.mxu0
    %1093 = vmatpush.msra.mxu0 %v856
    %1094 = vmatpush.msra.mxu0 %v853
    %1095 = vmatpush.msra.mxu0 %v850
    %1096 = vmatpush.msra.mxu0 %v847
    %1097 = vmatpush.msra.mxu0 %v844
    %1098 = vmatpush.msra.mxu0 %v841
    %1099 = vmatpush.msra.mxu0 %v838
    %1100 = vmatpush.msra.mxu0 %v835
    %1101 = vmatpush.msra.mxu0 %v832
    %1102 = vmatpush.msra.mxu0 %v829
    %1103 = vmatpush.msra.mxu0 %v826
    %1104 = vmatpush.msra.mxu0 %v823
    %1105 = vmatpush.msra.mxu0 %v820
    %1106 = vmatpush.msra.mxu0 %v817
    %1107 = vmatpush.msra.mxu0 %v814
    %1108 = vmatpush.msra.mxu0 %v811
    %1109 = vmatmul.f32.gmra.mxu0 %v1063
    %v1110 = vpop.f32.mrf.mxu0
    %v1111 = vadd.f32 %v1091, %v1110
    %1112 = vdwg.mxu0
    %1113 = vmatpush.msra.mxu0 %v904
    %1114 = vmatpush.msra.mxu0 %v901
    %1115 = vmatpush.msra.mxu0 %v898
    %1116 = vmatpush.msra.mxu0 %v895
    %1117 = vmatpush.msra.mxu0 %v892
    %1118 = vmatpush.msra.mxu0 %v889
    %1119 = vmatpush.msra.mxu0 %v886
    %1120 = vmatpush.msra.mxu0 %v883
    %1121 = vmatpush.msra.mxu0 %v880
    %1122 = vmatpush.msra.mxu0 %v877
    %1123 = vmatpush.msra.mxu0 %v874
    %1124 = vmatpush.msra.mxu0 %v871
    %1125 = vmatpush.msra.mxu0 %v868
    %1126 = vmatpush.msra.mxu0 %v865
    %1127 = vmatpush.msra.mxu0 %v862
    %1128 = vmatpush.msra.mxu0 %v859
    %1129 = vmatmul.f32.gmra.mxu0 %v1064
    %v1130 = vpop.f32.mrf.mxu0
    %v1131 = vadd.f32 %v1111, %v1130
    %1132 = vdwg.mxu0
    %1133 = vmatpush.msra.mxu0 %v952
    %1134 = vmatpush.msra.mxu0 %v949
    %1135 = vmatpush.msra.mxu0 %v946
    %1136 = vmatpush.msra.mxu0 %v943
    %1137 = vmatpush.msra.mxu0 %v940
    %1138 = vmatpush.msra.mxu0 %v937
    %1139 = vmatpush.msra.mxu0 %v934
    %1140 = vmatpush.msra.mxu0 %v931
    %1141 = vmatpush.msra.mxu0 %v928
    %1142 = vmatpush.msra.mxu0 %v925
    %1143 = vmatpush.msra.mxu0 %v922
    %1144 = vmatpush.msra.mxu0 %v919
    %1145 = vmatpush.msra.mxu0 %v916
    %1146 = vmatpush.msra.mxu0 %v913
    %1147 = vmatpush.msra.mxu0 %v910
    %1148 = vmatpush.msra.mxu0 %v907
    %1149 = vmatmul.f32.gmra.mxu0 %v1065
    %v1150 = vpop.f32.mrf.mxu0
    %v1151 = vadd.f32 %v1131, %v1150
    %1152 = vdwg.mxu0
    %1153 = vmatpush.msra.mxu0 %v809
    %1154 = vmatpush.msra.mxu0 %v806
    %1155 = vmatpush.msra.mxu0 %v803
    %1156 = vmatpush.msra.mxu0 %v800
    %1157 = vmatpush.msra.mxu0 %v797
    %1158 = vmatpush.msra.mxu0 %v794
    %1159 = vmatpush.msra.mxu0 %v791
    %1160 = vmatpush.msra.mxu0 %v788
    %1161 = vmatpush.msra.mxu0 %v785
    %1162 = vmatpush.msra.mxu0 %v782
    %1163 = vmatpush.msra.mxu0 %v779
    %1164 = vmatpush.msra.mxu0 %v776
    %1165 = vmatpush.msra.mxu0 %v773
    %1166 = vmatpush.msra.mxu0 %v770
    %1167 = vmatpush.msra.mxu0 %v767
    %1168 = vmatpush.msra.mxu0 %v764
    %1169 = vmatmul.f32.gmra.mxu0 %v1062
    %v1170 = vpop.f32.mrf.mxu0
    %v1171 = vadd.f32 %v1068, %v1170
    %1172 = vdwg.mxu0
    %1173 = vmatpush.msra.mxu0 %v857
    %1174 = vmatpush.msra.mxu0 %v854
    %1175 = vmatpush.msra.mxu0 %v851
    %1176 = vmatpush.msra.mxu0 %v848
    %1177 = vmatpush.msra.mxu0 %v845
    %1178 = vmatpush.msra.mxu0 %v842
    %1179 = vmatpush.msra.mxu0 %v839
    %1180 = vmatpush.msra.mxu0 %v836
    %1181 = vmatpush.msra.mxu0 %v833
    %1182 = vmatpush.msra.mxu0 %v830
    %1183 = vmatpush.msra.mxu0 %v827
    %1184 = vmatpush.msra.mxu0 %v824
    %1185 = vmatpush.msra.mxu0 %v821
    %1186 = vmatpush.msra.mxu0 %v818
    %1187 = vmatpush.msra.mxu0 %v815
    %1188 = vmatpush.msra.mxu0 %v812
    %1189 = vmatmul.f32.gmra.mxu0 %v1063
    %v1190 = vpop.f32.mrf.mxu0
    %v1191 = vadd.f32 %v1171, %v1190
    %1192 = vdwg.mxu0
    %1193 = vmatpush.msra.mxu0 %v905
    %1194 = vmatpush.msra.mxu0 %v902
    %1195 = vmatpush.msra.mxu0 %v899
    %1196 = vmatpush.msra.mxu0 %v896
    %1197 = vmatpush.msra.mxu0 %v893
    %1198 = vmatpush.msra.mxu0 %v890
    %1199 = vmatpush.msra.mxu0 %v887
    %1200 = vmatpush.msra.mxu0 %v884
    %1201 = vmatpush.msra.mxu0 %v881
    %1202 = vmatpush.msra.mxu0 %v878
    %1203 = vmatpush.msra.mxu0 %v875
    %1204 = vmatpush.msra.mxu0 %v872
    %1205 = vmatpush.msra.mxu0 %v869
    %1206 = vmatpush.msra.mxu0 %v866
    %1207 = vmatpush.msra.mxu0 %v863
    %1208 = vmatpush.msra.mxu0 %v860
    %1209 = vmatmul.f32.gmra.mxu0 %v1064
    %v1210 = vpop.f32.mrf.mxu0
    %v1211 = vadd.f32 %v1191, %v1210
    %1212 = vdwg.mxu0
    %1213 = vmatpush.msra.mxu0 %v953
    %1214 = vmatpush.msra.mxu0 %v950
    %1215 = vmatpush.msra.mxu0 %v947
    %1216 = vmatpush.msra.mxu0 %v944
    %1217 = vmatpush.msra.mxu0 %v941
    %1218 = vmatpush.msra.mxu0 %v938
    %1219 = vmatpush.msra.mxu0 %v935
    %1220 = vmatpush.msra.mxu0 %v932
    %1221 = vmatpush.msra.mxu0 %v929
    %1222 = vmatpush.msra.mxu0 %v926
    %1223 = vmatpush.msra.mxu0 %v923
    %1224 = vmatpush.msra.mxu0 %v920
    %1225 = vmatpush.msra.mxu0 %v917
    %1226 = vmatpush.msra.mxu0 %v914
    %1227 = vmatpush.msra.mxu0 %v911
    %1228 = vmatpush.msra.mxu0 %v908
    %1229 = vmatmul.f32.gmra.mxu0 %v1065
    %v1230 = vpop.f32.mrf.mxu0
    %v1231 = vadd.f32 %v1211, %v1230
    %1232 = vdwg.mxu0
    %1233 = vmatpush.msra.mxu0 %v810
    %1234 = vmatpush.msra.mxu0 %v807
    %1235 = vmatpush.msra.mxu0 %v804
    %1236 = vmatpush.msra.mxu0 %v801
    %1237 = vmatpush.msra.mxu0 %v798
    %1238 = vmatpush.msra.mxu0 %v795
    %1239 = vmatpush.msra.mxu0 %v792
    %1240 = vmatpush.msra.mxu0 %v789
    %1241 = vmatpush.msra.mxu0 %v786
    %1242 = vmatpush.msra.mxu0 %v783
    %1243 = vmatpush.msra.mxu0 %v780
    %1244 = vmatpush.msra.mxu0 %v777
    %1245 = vmatpush.msra.mxu0 %v774
    %1246 = vmatpush.msra.mxu0 %v771
    %1247 = vmatpush.msra.mxu0 %v768
    %1248 = vmatpush.msra.mxu0 %v765
    %1249 = vmatmul.f32.gmra.mxu0 %v1062
    %v1250 = vpop.f32.mrf.mxu0
    %v1251 = vadd.f32 %v1069, %v1250
    %1252 = vdwg.mxu0
    %1253 = vmatpush.msra.mxu0 %v858
    %1254 = vmatpush.msra.mxu0 %v855
    %1255 = vmatpush.msra.mxu0 %v852
    %1256 = vmatpush.msra.mxu0 %v849
    %1257 = vmatpush.msra.mxu0 %v846
    %1258 = vmatpush.msra.mxu0 %v843
    %1259 = vmatpush.msra.mxu0 %v840
    %1260 = vmatpush.msra.mxu0 %v837
    %1261 = vmatpush.msra.mxu0 %v834
    %1262 = vmatpush.msra.mxu0 %v831
    %1263 = vmatpush.msra.mxu0 %v828
    %1264 = vmatpush.msra.mxu0 %v825
    %1265 = vmatpush.msra.mxu0 %v822
    %1266 = vmatpush.msra.mxu0 %v819
    %1267 = vmatpush.msra.mxu0 %v816
    %1268 = vmatpush.msra.mxu0 %v813
    %1269 = vmatmul.f32.gmra.mxu0 %v1063
    %v1270 = vpop.f32.mrf.mxu0
    %v1271 = vadd.f32 %v1251, %v1270
    %1272 = vdwg.mxu0
    %1273 = vmatpush.msra.mxu0 %v906
    %1274 = vmatpush.msra.mxu0 %v903
    %1275 = vmatpush.msra.mxu0 %v900
    %1276 = vmatpush.msra.mxu0 %v897
    %1277 = vmatpush.msra.mxu0 %v894
    %1278 = vmatpush.msra.mxu0 %v891
    %1279 = vmatpush.msra.mxu0 %v888
    %1280 = vmatpush.msra.mxu0 %v885
    %1281 = vmatpush.msra.mxu0 %v882
    %1282 = vmatpush.msra.mxu0 %v879
    %1283 = vmatpush.msra.mxu0 %v876
    %1284 = vmatpush.msra.mxu0 %v873
    %1285 = vmatpush.msra.mxu0 %v870
    %1286 = vmatpush.msra.mxu0 %v867
    %1287 = vmatpush.msra.mxu0 %v864
    %1288 = vmatpush.msra.mxu0 %v861
    %1289 = vmatmul.f32.gmra.mxu0 %v1064
    %v1290 = vpop.f32.mrf.mxu0
    %v1291 = vadd.f32 %v1271, %v1290
    %1292 = vdwg.mxu0
    %1293 = vmatpush.msra.mxu0 %v954
    %1294 = vmatpush.msra.mxu0 %v951
    %1295 = vmatpush.msra.mxu0 %v948
    %1296 = vmatpush.msra.mxu0 %v945
    %1297 = vmatpush.msra.mxu0 %v942
    %1298 = vmatpush.msra.mxu0 %v939
    %1299 = vmatpush.msra.mxu0 %v936
    %1300 = vmatpush.msra.mxu0 %v933
    %1301 = vmatpush.msra.mxu0 %v930
    %1302 = vmatpush.msra.mxu0 %v927
    %1303 = vmatpush.msra.mxu0 %v924
    %1304 = vmatpush.msra.mxu0 %v921
    %1305 = vmatpush.msra.mxu0 %v918
    %1306 = vmatpush.msra.mxu0 %v915
    %1307 = vmatpush.msra.mxu0 %v912
    %1308 = vmatpush.msra.mxu0 %v909
    %1309 = vmatmul.f32.gmra.mxu0 %v1065
    %v1310 = vpop.f32.mrf.mxu0
    %v1311 = vadd.f32 %v1291, %v1310
    %1312 = vdwg.mxu0
    %v1313 = vmax.f32 %v1151, 0.0
    %v1314 = vmax.f32 %v1231, 0.0
    %v1315 = vmax.f32 %v1311, 0.0
    %1317 = vset.pattern.permute.xlu0 0
    %1318 = vperm.xlu0 %1317, %v960
    %v1319 = vpop.permute.xlu0 %1318
    %v1321 = vperm.slane %v1319, 0
    %v1323 = vperm.slane %v958, 0
    %v1324 = vperm.slane %v958, 1
    %v1325 = vperm.slane %v958, 2
    %1329 = vmatpush.xpose.msra.mxu0 0.0
    %1330 = vmatpush.xpose.msra.mxu0 0.0
    %1331 = vmatpush.xpose.msra.mxu0 0.0
    %1332 = vmatpush.xpose.msra.mxu0 0.0
    %1333 = vmatpush.xpose.msra.mxu0 0.0
    %1334 = vmatpush.xpose.msra.mxu0 0.0
    %1335 = vmatpush.xpose.msra.mxu0 0.0
    %1336 = vmatpush.xpose.msra.mxu0 0.0
    %1337 = vmatpush.xpose.msra.mxu0 0.0
    %1338 = vmatpush.xpose.msra.mxu0 0.0
    %1339 = vmatpush.xpose.msra.mxu0 0.0
    %1340 = vmatpush.xpose.msra.mxu0 0.0
    %1341 = vmatpush.xpose.msra.mxu0 0.0
    %1342 = vmatpush.xpose.msra.mxu0 0.0
    %1343 = vmatpush.xpose.msra.mxu0 0.0
    %1344 = vmatpush.xpose.msra.mxu0 %v1313
    %1345 = vmatmul.f32.gmra.mxu0 %v1323
    %v1346 = vpop.f32.mrf.mxu0
    %v1347 = vadd.f32 %v1321, %v1346
    %1348 = vdwg.mxu0
    %1349 = vmatpush.xpose.msra.mxu0 0.0
    %1350 = vmatpush.xpose.msra.mxu0 0.0
    %1351 = vmatpush.xpose.msra.mxu0 0.0
    %1352 = vmatpush.xpose.msra.mxu0 0.0
    %1353 = vmatpush.xpose.msra.mxu0 0.0
    %1354 = vmatpush.xpose.msra.mxu0 0.0
    %1355 = vmatpush.xpose.msra.mxu0 0.0
    %1356 = vmatpush.xpose.msra.mxu0 0.0
    %1357 = vmatpush.xpose.msra.mxu0 0.0
    %1358 = vmatpush.xpose.msra.mxu0 0.0
    %1359 = vmatpush.xpose.msra.mxu0 0.0
    %1360 = vmatpush.xpose.msra.mxu0 0.0
    %1361 = vmatpush.xpose.msra.mxu0 0.0
    %1362 = vmatpush.xpose.msra.mxu0 0.0
    %1363 = vmatpush.xpose.msra.mxu0 0.0
    %1364 = vmatpush.xpose.msra.mxu0 %v1314
    %1365 = vmatmul.f32.gmra.mxu0 %v1324
    %v1366 = vpop.f32.mrf.mxu0
    %v1367 = vadd.f32 %v1347, %v1366
    %1368 = vdwg.mxu0
    %1369 = vmatpush.xpose.msra.mxu0 0.0
    %1370 = vmatpush.xpose.msra.mxu0 0.0
    %1371 = vmatpush.xpose.msra.mxu0 0.0
    %1372 = vmatpush.xpose.msra.mxu0 0.0
    %1373 = vmatpush.xpose.msra.mxu0 0.0
    %1374 = vmatpush.xpose.msra.mxu0 0.0
    %1375 = vmatpush.xpose.msra.mxu0 0.0
    %1376 = vmatpush.xpose.msra.mxu0 0.0
    %1377 = vmatpush.xpose.msra.mxu0 0.0
    %1378 = vmatpush.xpose.msra.mxu0 0.0
    %1379 = vmatpush.xpose.msra.mxu0 0.0
    %1380 = vmatpush.xpose.msra.mxu0 0.0
    %1381 = vmatpush.xpose.msra.mxu0 0.0
    %1382 = vmatpush.xpose.msra.mxu0 0.0
    %1383 = vmatpush.xpose.msra.mxu0 0.0
    %1384 = vmatpush.xpose.msra.mxu0 %v1315
    %1385 = vmatmul.f32.gmra.mxu0 %v1325
    %v1386 = vpop.f32.mrf.mxu0
    %v1387 = vadd.f32 %v1367, %v1386
    %1388 = vdwg.mxu0
    %s1389 = scalar_lea.vmem [#allocation11], 1
    %1390 = vst.msk [vmem:[%s1389] sm:$0x1] %vm745, %v1387
    // Predicated region
    $region50: #{tpu_custom_call.1} parent=1 // pred_check
      _
    $region51: #{tpu_custom_call.1} parent=1 // pred_check_branch
      %1392 = sbr.rel (0) target = $region53
    $region52: #{tpu_custom_call.1} parent=1 // pred_region
      %1394 = vsyncadd [#allocation4], 0
      %s1395 = sshll.u32 [#allocation11], 4
      %s1396 = int_to_ptr.vmem [resolvable:$true] %s1395
      %s1397 = sshll.u32 %s7, 4
      %s1398 = int_to_ptr.hbm [resolvable:$true] %s1397
      %1403 = dma.vmem_to_hbm [thread:$0]  %s1396, 32, %s1398, [#allocation4], 16, 16, 1
    $region53: #{tpu_custom_call.1} parent=1 // pred_fallthru
      _
    // Predicated region
    $region54: #{tpu_custom_call.1} parent=1 // pred_check
      _
    $region55: #{tpu_custom_call.1} parent=1 // pred_check_branch
      %1405 = sbr.rel (0) target = $region57
    $region56: #{tpu_custom_call.1} parent=1 // pred_region
      %1407 = dma.done [#allocation4], 32
    $region57: #{tpu_custom_call.1} parent=1 // pred_fallthru
      _
    %1408 = vsyncpa [#allocation3], 1
    %1409 = vsyncpa [#allocation6], 1
    %1410 = vsyncpa [#allocation9], 1
    %1411 = vsyncpa [#allocation4], 1

</llo_original>
